<compile_context>
chip_gen: v6e
topology: v6e:2x2x1
jax: 0.10.0
libtpu: 0.0.40
codegen_flags: <defaults>
</compile_context>

<pallas_src>
import jax
import jax.numpy as jnp
from jax.experimental import pallas as pl
from jax.experimental.pallas import tpu as pltpu

LANE = 128          # channel padding target (full TPU lane width)
F32 = jnp.float32
BF16 = jnp.bfloat16
BN_EPS = 1e-5


# ----------------------------------------------------------------------------
# Shared math (used by the Pallas kernel and by the pure-JAX reference check)
# ----------------------------------------------------------------------------
def _bn_relu(pre, gamma, beta):
    # PyTorch training-mode BatchNorm semantics (batch statistics, biased var).
    mean = jnp.mean(pre, axis=0, keepdims=True)
    var = jnp.mean(jnp.square(pre - mean), axis=0, keepdims=True)
    xhat = (pre - mean) * jax.lax.rsqrt(var + BN_EPS)
    return jnp.maximum(xhat * gamma + beta, 0.0)


def _block_math(x, feat, sel, tmask, src_oh, dst_ohT, sup_sel,
                we1, ge1, be1, wself1, wcat1, gn1, bn1,
                we2, ge2, be2, wself2, wcat2, gn2, bn2):
    # ---- conv_E -> bn_E -> relu -> feature = out + feature
    pre_e1 = jnp.dot(feat.astype(BF16), we1, preferred_element_type=F32)
    feat = _bn_relu(pre_e1, ge1, be1) + feat

    # ---- BatchReversalToEdge #1 : row-selection matmul + constant temp rows
    ei1 = jnp.dot(sel, feat, preferred_element_type=F32) + tmask      # (E, C)

    # ---- conv_N -> bn_N -> relu -> out = out + x
    x_src = jnp.dot(src_oh, x, preferred_element_type=F32)            # gather
    xe1 = jnp.concatenate([x_src, ei1], axis=1).astype(BF16)          # (E, 2C)
    msg1 = jnp.dot(xe1, wcat1, preferred_element_type=F32)            # (E, C)
    agg1 = jnp.dot(dst_ohT, msg1, preferred_element_type=F32)         # scatter
    pre_n1 = jnp.dot(x.astype(BF16), wself1, preferred_element_type=F32) + agg1
    out = _bn_relu(pre_n1, gn1, bn1) + x

    # ---- conv_E2 -> bn_E2 -> relu -> feature = -out2 + feature
    pre_e2 = jnp.dot(feat.astype(BF16), we2, preferred_element_type=F32)
    feat = -_bn_relu(pre_e2, ge2, be2) + feat

    # ---- BatchReversalToEdge #2
    ei2 = jnp.dot(sel, feat, preferred_element_type=F32) + tmask

    # ---- conv_N2 -> bn_N2 -> relu -> out2 = -out2 + out
    out_src = jnp.dot(src_oh, out, preferred_element_type=F32)
    xe2 = jnp.concatenate([out_src, ei2], axis=1).astype(BF16)
    msg2 = jnp.dot(xe2, wcat2, preferred_element_type=F32)
    agg2 = jnp.dot(dst_ohT, msg2, preferred_element_type=F32)
    pre_n2 = jnp.dot(out.astype(BF16), wself2, preferred_element_type=F32) + agg2
    out2 = -_bn_relu(pre_n2, gn2, bn2) + out

    # ---- GetSuperNode : last node of each graph (selection matmul)
    sup = jnp.dot(sup_sel, out2, preferred_element_type=F32)
    return out2, feat, ei2, sup


# ----------------------------------------------------------------------------
# Single fused Pallas kernel for the whole Block
# ----------------------------------------------------------------------------
def _block_kernel(x_ref, feat_ref, sel_ref, tmask_ref, src_oh_ref, dst_ohT_ref,
                  sup_sel_ref,
                  we1_ref, ge1_ref, be1_ref,
                  wself1_ref, wcat1_ref, gn1_ref, bn1_ref,
                  we2_ref, ge2_ref, be2_ref,
                  wself2_ref, wcat2_ref, gn2_ref, bn2_ref,
                  out2_ref, feat_out_ref, ei_out_ref, sup_ref):
    out2, feat, ei2, sup = _block_math(
        x_ref[...], feat_ref[...], sel_ref[...], tmask_ref[...],
        src_oh_ref[...], dst_ohT_ref[...], sup_sel_ref[...],
        we1_ref[...], ge1_ref[...], be1_ref[...],
        wself1_ref[...], wcat1_ref[...], gn1_ref[...], bn1_ref[...],
        we2_ref[...], ge2_ref[...], be2_ref[...],
        wself2_ref[...], wcat2_ref[...], gn2_ref[...], bn2_ref[...])
    out2_ref[...] = out2
    feat_out_ref[...] = feat
    ei_out_ref[...] = ei2
    sup_ref[...] = sup


# ----------------------------------------------------------------------------
# Host-side (one-time) graph bookkeeping -> static selection matrices
# ----------------------------------------------------------------------------
def compute_node_num(batch):
    num = 0
    temp = 0
    class_num = []
    for i in batch:
        if i == num:
            temp += 1
        else:
            num += 1
            class_num.append(temp)
            temp = 1
    class_num.append(temp)
    return class_num


def build_edge_inform_pattern(batch, br_batch, com_num):
    """Row-source pattern of BatchReversalToEdge.

    Returns a list: feature-row index per output row, or -1 for the constant
    'temp' row ([1, 0, 0, ...]).
    """
    node_num = compute_node_num(batch)
    class_num = compute_node_num(br_batch)
    pattern = []
    offs = 0
    for i, cnum in enumerate(class_num):
        for j in range(com_num[i]):
            pattern += [offs + j, offs + j]
        pattern += [-1] * node_num[i]
        pattern += [offs + j for j in range(com_num[i], cnum)]
        offs += cnum
    return pattern


def build_graph_structs(batch, pattern, src, dst, num_feature_rows):
    """Precompute all graph-dependent 0/1 selection matrices (built ONCE)."""
    num_nodes = len(batch)
    sel_rows, tmask_rows = [], []
    for idx in pattern:
        s = [0.0] * num_feature_rows
        t = [0.0] * LANE
        if idx < 0:
            t[0] = 1.0
        else:
            s[idx] = 1.0
        sel_rows.append(s)
        tmask_rows.append(t)
    sel = jnp.array(sel_rows, F32)                                     # (E, R)
    tmask = jnp.array(tmask_rows, F32)                                 # (E, LANE)

    src_oh = jax.nn.one_hot(jnp.array(src, jnp.int32), num_nodes, dtype=F32)
    dst_ohT = jax.nn.one_hot(jnp.array(dst, jnp.int32), num_nodes, dtype=F32).T

    node_num = compute_node_num(batch)
    last, t0 = [], 0
    for c in node_num:
        last.append(t0 + c - 1)
        t0 += c
    sup_sel = jax.nn.one_hot(jnp.array(last, jnp.int32), num_nodes, dtype=F32)

    return {'sel': sel, 'tmask': tmask, 'src_oh': src_oh,
            'dst_ohT': dst_ohT, 'sup_sel': sup_sel}


# ----------------------------------------------------------------------------
# Parameters (zero-padded to 128 lanes; weights stored in bf16 for the MXU)
# ----------------------------------------------------------------------------
def init_block_params(key, N_in, N_out, E_in, E_out):
    ks = jax.random.split(key, 16)

    def lin(k, shape):
        return (0.1 * jax.random.normal(k, shape)).astype(F32)

    def bn_vecs(kg, kb, n):
        gamma = jnp.zeros((1, LANE), F32).at[0, :n].set(
            1.0 + 0.05 * jax.random.normal(kg, (n,)))
        beta = jnp.zeros((1, LANE), F32).at[0, :n].set(
            0.05 * jax.random.normal(kb, (n,)))
        return gamma, beta

    def pad_w(w):
        out = jnp.zeros((LANE, LANE), F32)
        return out.at[:w.shape[0], :w.shape[1]].set(w).astype(BF16)

    def cat_w(w_msg, w_edge):
        # Stacked [W_msg ; W_edge] so the two message matmuls fuse into one.
        out = jnp.zeros((2 * LANE, LANE), F32)
        out = out.at[:w_msg.shape[0], :w_msg.shape[1]].set(w_msg)
        out = out.at[LANE:LANE + w_edge.shape[0], :w_edge.shape[1]].set(w_edge)
        return out.astype(BF16)

    gE1, betaE1 = bn_vecs(ks[0], ks[1], E_out)
    gN1, betaN1 = bn_vecs(ks[2], ks[3], N_out)
    gE2, betaE2 = bn_vecs(ks[4], ks[5], E_out)
    gN2, betaN2 = bn_vecs(ks[6], ks[7], N_out)

    # NOTE: SuperConv bias terms are intentionally omitted — a per-channel
    # constant added before training-mode BatchNorm is cancelled by the mean
    # subtraction and cannot affect the output.
    return {
        'WE1': pad_w(lin(ks[8], (E_in, E_out))), 'gE1': gE1, 'betaE1': betaE1,
        'WselfN1': pad_w(lin(ks[9], (N_in, N_out))),
        'WcatN1': cat_w(lin(ks[10], (N_in, N_out)), lin(ks[11], (E_out, N_out))),
        'gN1': gN1, 'betaN1': betaN1,
        'WE2': pad_w(lin(ks[12], (E_out, E_out))), 'gE2': gE2, 'betaE2': betaE2,
        'WselfN2': pad_w(lin(ks[13], (N_out, N_out))),
        'WcatN2': cat_w(lin(ks[14], (N_out, N_out)), lin(ks[15], (E_out, N_out))),
        'gN2': gN2, 'betaN2': betaN2,
    }


# ----------------------------------------------------------------------------
# Forward
# ----------------------------------------------------------------------------
def _pad_lanes(a, width=LANE):
    r, c = a.shape
    return jnp.pad(a, ((0, 0), (0, width - c))) if c < width else a


def _prepare_inputs(params, x, feature, graph):
    p = params
    return (_pad_lanes(x.astype(F32)), _pad_lanes(feature.astype(F32)),
            graph['sel'], graph['tmask'], graph['src_oh'], graph['dst_ohT'],
            graph['sup_sel'],
            p['WE1'], p['gE1'], p['betaE1'],
            p['WselfN1'], p['WcatN1'], p['gN1'], p['betaN1'],
            p['WE2'], p['gE2'], p['betaE2'],
            p['WselfN2'], p['WcatN2'], p['gN2'], p['betaN2'])


def block_forward(params, x, edge_inform, batch_reversal, graph, *, N_out, E_out):
    del edge_inform  # overwritten inside the forward, exactly as in the module
    feature = batch_reversal['feature']
    args = _prepare_inputs(params, x, feature, graph)

    num_nodes = x.shape[0]
    num_rows = feature.shape[0]
    num_edges = graph['sel'].shape[0]
    num_graphs = graph['sup_sel'].shape[0]

    out_shape = (jax.ShapeDtypeStruct((num_nodes, LANE), F32),   # out2
                 jax.ShapeDtypeStruct((num_rows, LANE), F32),    # feature
                 jax.ShapeDtypeStruct((num_edges, LANE), F32),   # edge_inform
                 jax.ShapeDtypeStruct((num_graphs, LANE), F32))  # super_node

    out2_p, feat_p, ei_p, sup_p = pl.pallas_call(
        _block_kernel,
        out_shape=out_shape,
        in_specs=[pl.BlockSpec(a.shape, lambda: (0, 0)) for a in args],
        out_specs=tuple(pl.BlockSpec(s.shape, lambda: (0, 0)) for s in out_shape),
        compiler_params=pltpu.CompilerParams(vmem_limit_bytes=32 * 1024 * 1024),
    )(*args)

    br_out = dict(batch_reversal)
    br_out['feature'] = feat_p[:, :E_out]
    return out2_p[:, :N_out], ei_p[:, :E_out], br_out, sup_p[:, :N_out]


def reference_forward(params, x, feature, graph, *, N_out, E_out):
    """Pure-JAX (XLA) version of the identical math, for a correctness check."""
    args = _prepare_inputs(params, x, feature, graph)
    out2_p, feat_p, ei_p, sup_p = _block_math(*args)
    return out2_p[:, :N_out], ei_p[:, :E_out], feat_p[:, :E_out], sup_p[:, :N_out]


# ----------------------------------------------------------------------------
# main
# ----------------------------------------------------------------------------
if __name__ == "__main__":
    key = jax.random.PRNGKey(0)
    k_param, k_x, k_feat = jax.random.split(key, 3)

    # Small config (module defaults scaled down): N channels 32, E channels 8.
    N_IN = N_OUT = 32
    E_IN = E_OUT = 8

    # Two graphs: 4 + 3 nodes.
    batch = [0, 0, 0, 0, 1, 1, 1]
    num_nodes = len(batch)

    # BatchReversal rows: graph 0 has 5 rows (com_num=2), graph 1 has 3 (com_num=1).
    br_batch = [0, 0, 0, 0, 0, 1, 1, 1]
    com_num = [2, 1]
    feature = jax.random.normal(k_feat, (len(br_batch), E_IN), dtype=F32)
    batch_reversal = {'feature': feature, 'batch': br_batch, 'com_num': com_num}

    # One-time host precompute of all graph structure (no per-call Python loops).
    pattern = build_edge_inform_pattern(batch, br_batch, com_num)
    num_edges = len(pattern)                       # 2*2+4+3 + 2*1+3+2 = 18
    src = [(3 * i) % num_nodes for i in range(num_edges)]
    dst = [(5 * i + 1) % num_nodes for i in range(num_edges)]
    graph = build_graph_structs(batch, pattern, src, dst, len(br_batch))

    x = jax.random.normal(k_x, (num_nodes, N_IN), dtype=F32)
    edge_inform_in = jnp.zeros((num_edges, E_OUT), F32)   # overwritten by forward
    params = init_block_params(k_param, N_IN, N_OUT, E_IN, E_OUT)

    out2, edge_inform, br_out, super_node = block_forward(
        params, x, edge_inform_in, batch_reversal, graph,
        N_out=N_OUT, E_out=E_OUT)
    jax.block_until_ready((out2, edge_inform, br_out['feature'], super_node))

    assert out2.shape == (num_nodes, N_OUT)
    assert edge_inform.shape == (num_edges, E_OUT)
    assert br_out['feature'].shape == (len(br_batch), E_OUT)
    assert super_node.shape == (len(com_num), N_OUT)

    # Correctness check against the identical math run through plain XLA.
    r_out2, r_ei, r_feat, r_sup = reference_forward(
        params, x, feature, graph, N_out=N_OUT, E_out=E_OUT)
    for got, want in ((out2, r_out2), (edge_inform, r_ei),
                      (br_out['feature'], r_feat), (super_node, r_sup)):
        err = float(jnp.max(jnp.abs(got - want)))
        assert err < 5e-2, f"pallas vs reference mismatch: max abs err {err}"

    print("KERNEL_OK")
</pallas_src>

<mosaic_0001>
module attributes {stable_mosaic.version = 11 : i64} {
  func.func @_block_kernel(%arg0: memref<7x128xf32, #tpu.memory_space<vmem>>, %arg1: memref<8x128xf32, #tpu.memory_space<vmem>>, %arg2: memref<18x8xf32, #tpu.memory_space<vmem>>, %arg3: memref<18x128xf32, #tpu.memory_space<vmem>>, %arg4: memref<18x7xf32, #tpu.memory_space<vmem>>, %arg5: memref<7x18xf32, #tpu.memory_space<vmem>>, %arg6: memref<2x7xf32, #tpu.memory_space<vmem>>, %arg7: memref<128x128xbf16, #tpu.memory_space<vmem>>, %arg8: memref<1x128xf32, #tpu.memory_space<vmem>>, %arg9: memref<1x128xf32, #tpu.memory_space<vmem>>, %arg10: memref<128x128xbf16, #tpu.memory_space<vmem>>, %arg11: memref<256x128xbf16, #tpu.memory_space<vmem>>, %arg12: memref<1x128xf32, #tpu.memory_space<vmem>>, %arg13: memref<1x128xf32, #tpu.memory_space<vmem>>, %arg14: memref<128x128xbf16, #tpu.memory_space<vmem>>, %arg15: memref<1x128xf32, #tpu.memory_space<vmem>>, %arg16: memref<1x128xf32, #tpu.memory_space<vmem>>, %arg17: memref<128x128xbf16, #tpu.memory_space<vmem>>, %arg18: memref<256x128xbf16, #tpu.memory_space<vmem>>, %arg19: memref<1x128xf32, #tpu.memory_space<vmem>>, %arg20: memref<1x128xf32, #tpu.memory_space<vmem>>, %arg21: memref<7x128xf32, #tpu.memory_space<vmem>>, %arg22: memref<8x128xf32, #tpu.memory_space<vmem>>, %arg23: memref<18x128xf32, #tpu.memory_space<vmem>>, %arg24: memref<2x128xf32, #tpu.memory_space<vmem>>) attributes {dimension_semantics = [], scalar_prefetch = 0 : i64, scratch_operands = 0 : i64, tpu.core_type = #tpu.core_type<tc>} {
    %c0 = arith.constant 0 : index
    %c0_0 = arith.constant 0 : index
    %0 = vector.load %arg0[%c0, %c0_0] : memref<7x128xf32, #tpu.memory_space<vmem>>, vector<7x128xf32>
    %c0_1 = arith.constant 0 : index
    %c0_2 = arith.constant 0 : index
    %1 = vector.load %arg1[%c0_1, %c0_2] : memref<8x128xf32, #tpu.memory_space<vmem>>, vector<8x128xf32>
    %c0_3 = arith.constant 0 : index
    %c0_4 = arith.constant 0 : index
    %2 = vector.load %arg2[%c0_3, %c0_4] : memref<18x8xf32, #tpu.memory_space<vmem>>, vector<18x8xf32>
    %c0_5 = arith.constant 0 : index
    %c0_6 = arith.constant 0 : index
    %3 = vector.load %arg3[%c0_5, %c0_6] : memref<18x128xf32, #tpu.memory_space<vmem>>, vector<18x128xf32>
    %c0_7 = arith.constant 0 : index
    %c0_8 = arith.constant 0 : index
    %4 = vector.load %arg4[%c0_7, %c0_8] : memref<18x7xf32, #tpu.memory_space<vmem>>, vector<18x7xf32>
    %c0_9 = arith.constant 0 : index
    %c0_10 = arith.constant 0 : index
    %5 = vector.load %arg5[%c0_9, %c0_10] : memref<7x18xf32, #tpu.memory_space<vmem>>, vector<7x18xf32>
    %c0_11 = arith.constant 0 : index
    %c0_12 = arith.constant 0 : index
    %6 = vector.load %arg6[%c0_11, %c0_12] : memref<2x7xf32, #tpu.memory_space<vmem>>, vector<2x7xf32>
    %c0_13 = arith.constant 0 : index
    %c0_14 = arith.constant 0 : index
    %7 = vector.load %arg7[%c0_13, %c0_14] : memref<128x128xbf16, #tpu.memory_space<vmem>>, vector<128x128xbf16>
    %c0_15 = arith.constant 0 : index
    %c0_16 = arith.constant 0 : index
    %8 = vector.load %arg8[%c0_15, %c0_16] : memref<1x128xf32, #tpu.memory_space<vmem>>, vector<1x128xf32>
    %c0_17 = arith.constant 0 : index
    %c0_18 = arith.constant 0 : index
    %9 = vector.load %arg9[%c0_17, %c0_18] : memref<1x128xf32, #tpu.memory_space<vmem>>, vector<1x128xf32>
    %c0_19 = arith.constant 0 : index
    %c0_20 = arith.constant 0 : index
    %10 = vector.load %arg10[%c0_19, %c0_20] : memref<128x128xbf16, #tpu.memory_space<vmem>>, vector<128x128xbf16>
    %c0_21 = arith.constant 0 : index
    %c0_22 = arith.constant 0 : index
    %11 = vector.load %arg11[%c0_21, %c0_22] : memref<256x128xbf16, #tpu.memory_space<vmem>>, vector<256x128xbf16>
    %c0_23 = arith.constant 0 : index
    %c0_24 = arith.constant 0 : index
    %12 = vector.load %arg12[%c0_23, %c0_24] : memref<1x128xf32, #tpu.memory_space<vmem>>, vector<1x128xf32>
    %c0_25 = arith.constant 0 : index
    %c0_26 = arith.constant 0 : index
    %13 = vector.load %arg13[%c0_25, %c0_26] : memref<1x128xf32, #tpu.memory_space<vmem>>, vector<1x128xf32>
    %c0_27 = arith.constant 0 : index
    %c0_28 = arith.constant 0 : index
    %14 = vector.load %arg14[%c0_27, %c0_28] : memref<128x128xbf16, #tpu.memory_space<vmem>>, vector<128x128xbf16>
    %c0_29 = arith.constant 0 : index
    %c0_30 = arith.constant 0 : index
    %15 = vector.load %arg15[%c0_29, %c0_30] : memref<1x128xf32, #tpu.memory_space<vmem>>, vector<1x128xf32>
    %c0_31 = arith.constant 0 : index
    %c0_32 = arith.constant 0 : index
    %16 = vector.load %arg16[%c0_31, %c0_32] : memref<1x128xf32, #tpu.memory_space<vmem>>, vector<1x128xf32>
    %c0_33 = arith.constant 0 : index
    %c0_34 = arith.constant 0 : index
    %17 = vector.load %arg17[%c0_33, %c0_34] : memref<128x128xbf16, #tpu.memory_space<vmem>>, vector<128x128xbf16>
    %c0_35 = arith.constant 0 : index
    %c0_36 = arith.constant 0 : index
    %18 = vector.load %arg18[%c0_35, %c0_36] : memref<256x128xbf16, #tpu.memory_space<vmem>>, vector<256x128xbf16>
    %c0_37 = arith.constant 0 : index
    %c0_38 = arith.constant 0 : index
    %19 = vector.load %arg19[%c0_37, %c0_38] : memref<1x128xf32, #tpu.memory_space<vmem>>, vector<1x128xf32>
    %c0_39 = arith.constant 0 : index
    %c0_40 = arith.constant 0 : index
    %20 = vector.load %arg20[%c0_39, %c0_40] : memref<1x128xf32, #tpu.memory_space<vmem>>, vector<1x128xf32>
    %21 = arith.truncf %1 : vector<8x128xf32> to vector<8x128xbf16>
    %cst = arith.constant dense<0.000000e+00> : vector<8x128xf32>
    %22 = tpu.matmul %21, %7, %cst {dimension_numbers = #tpu.dot_dimension_numbers<[1], [0], [0], [1], [0, 0, 1, 1], [], []>} : vector<8x128xbf16>, vector<128x128xbf16>, vector<8x128xf32> -> vector<8x128xf32>
    %cst_41 = arith.constant dense<0.000000e+00> : vector<128xf32>
    %23 = vector.multi_reduction <add>, %22, %cst_41 [0] : vector<8x128xf32> to vector<128xf32>
    %24 = vector.shape_cast %23 : vector<128xf32> to vector<1x128xf32>
    %cst_42 = arith.constant 8.000000e+00 : f32
    %25 = vector.broadcast %cst_42 : f32 to vector<1x128xf32>
    %26 = arith.divf %24, %25 : vector<1x128xf32>
    %27 = vector.broadcast %26 : vector<1x128xf32> to vector<8x128xf32>
    %28 = arith.subf %22, %27 : vector<8x128xf32>
    %29 = arith.mulf %28, %28 : vector<8x128xf32>
    %cst_43 = arith.constant dense<0.000000e+00> : vector<128xf32>
    %30 = vector.multi_reduction <add>, %29, %cst_43 [0] : vector<8x128xf32> to vector<128xf32>
    %31 = vector.shape_cast %30 : vector<128xf32> to vector<1x128xf32>
    %cst_44 = arith.constant 8.000000e+00 : f32
    %32 = vector.broadcast %cst_44 : f32 to vector<1x128xf32>
    %33 = arith.divf %31, %32 : vector<1x128xf32>
    %34 = vector.broadcast %26 : vector<1x128xf32> to vector<8x128xf32>
    %35 = arith.subf %22, %34 : vector<8x128xf32>
    %cst_45 = arith.constant 9.99999974E-6 : f32
    %36 = vector.broadcast %cst_45 : f32 to vector<1x128xf32>
    %37 = arith.addf %33, %36 : vector<1x128xf32>
    %38 = math.rsqrt %37 : vector<1x128xf32>
    %39 = vector.broadcast %38 : vector<1x128xf32> to vector<8x128xf32>
    %40 = arith.mulf %35, %39 : vector<8x128xf32>
    %41 = vector.broadcast %8 : vector<1x128xf32> to vector<8x128xf32>
    %42 = arith.mulf %40, %41 : vector<8x128xf32>
    %43 = vector.broadcast %9 : vector<1x128xf32> to vector<8x128xf32>
    %44 = arith.addf %42, %43 : vector<8x128xf32>
    %cst_46 = arith.constant 0.000000e+00 : f32
    %45 = vector.broadcast %cst_46 : f32 to vector<8x128xf32>
    %46 = arith.maximumf %44, %45 : vector<8x128xf32>
    %47 = arith.addf %46, %1 : vector<8x128xf32>
    %cst_47 = arith.constant dense<0.000000e+00> : vector<18x128xf32>
    %48 = tpu.matmul %2, %47, %cst_47 {dimension_numbers = #tpu.dot_dimension_numbers<[1], [0], [0], [1], [0, 0, 1, 1], [], []>} : vector<18x8xf32>, vector<8x128xf32>, vector<18x128xf32> -> vector<18x128xf32>
    %49 = arith.addf %48, %3 : vector<18x128xf32>
    %cst_48 = arith.constant dense<0.000000e+00> : vector<18x128xf32>
    %50 = tpu.matmul %4, %0, %cst_48 {dimension_numbers = #tpu.dot_dimension_numbers<[1], [0], [0], [1], [0, 0, 1, 1], [], []>} : vector<18x7xf32>, vector<7x128xf32>, vector<18x128xf32> -> vector<18x128xf32>
    %51 = tpu.concatenate %50, %49 in 1 : vector<18x128xf32>, vector<18x128xf32> -> vector<18x256xf32>
    %52 = arith.truncf %51 : vector<18x256xf32> to vector<18x256xbf16>
    %cst_49 = arith.constant dense<0.000000e+00> : vector<18x128xf32>
    %53 = tpu.matmul %52, %11, %cst_49 {dimension_numbers = #tpu.dot_dimension_numbers<[1], [0], [0], [1], [0, 0, 1, 1], [], []>} : vector<18x256xbf16>, vector<256x128xbf16>, vector<18x128xf32> -> vector<18x128xf32>
    %cst_50 = arith.constant dense<0.000000e+00> : vector<7x128xf32>
    %54 = tpu.matmul %5, %53, %cst_50 {dimension_numbers = #tpu.dot_dimension_numbers<[1], [0], [0], [1], [0, 0, 1, 1], [], []>} : vector<7x18xf32>, vector<18x128xf32>, vector<7x128xf32> -> vector<7x128xf32>
    %55 = arith.truncf %0 : vector<7x128xf32> to vector<7x128xbf16>
    %cst_51 = arith.constant dense<0.000000e+00> : vector<7x128xf32>
    %56 = tpu.matmul %55, %10, %cst_51 {dimension_numbers = #tpu.dot_dimension_numbers<[1], [0], [0], [1], [0, 0, 1, 1], [], []>} : vector<7x128xbf16>, vector<128x128xbf16>, vector<7x128xf32> -> vector<7x128xf32>
    %57 = arith.addf %56, %54 : vector<7x128xf32>
    %cst_52 = arith.constant dense<0.000000e+00> : vector<128xf32>
    %58 = vector.multi_reduction <add>, %57, %cst_52 [0] : vector<7x128xf32> to vector<128xf32>
    %59 = vector.shape_cast %58 : vector<128xf32> to vector<1x128xf32>
    %cst_53 = arith.constant 7.000000e+00 : f32
    %60 = vector.broadcast %cst_53 : f32 to vector<1x128xf32>
    %61 = arith.divf %59, %60 : vector<1x128xf32>
    %62 = vector.broadcast %61 : vector<1x128xf32> to vector<7x128xf32>
    %63 = arith.subf %57, %62 : vector<7x128xf32>
    %64 = arith.mulf %63, %63 : vector<7x128xf32>
    %cst_54 = arith.constant dense<0.000000e+00> : vector<128xf32>
    %65 = vector.multi_reduction <add>, %64, %cst_54 [0] : vector<7x128xf32> to vector<128xf32>
    %66 = vector.shape_cast %65 : vector<128xf32> to vector<1x128xf32>
    %cst_55 = arith.constant 7.000000e+00 : f32
    %67 = vector.broadcast %cst_55 : f32 to vector<1x128xf32>
    %68 = arith.divf %66, %67 : vector<1x128xf32>
    %69 = vector.broadcast %61 : vector<1x128xf32> to vector<7x128xf32>
    %70 = arith.subf %57, %69 : vector<7x128xf32>
    %cst_56 = arith.constant 9.99999974E-6 : f32
    %71 = vector.broadcast %cst_56 : f32 to vector<1x128xf32>
    %72 = arith.addf %68, %71 : vector<1x128xf32>
    %73 = math.rsqrt %72 : vector<1x128xf32>
    %74 = vector.broadcast %73 : vector<1x128xf32> to vector<7x128xf32>
    %75 = arith.mulf %70, %74 : vector<7x128xf32>
    %76 = vector.broadcast %12 : vector<1x128xf32> to vector<7x128xf32>
    %77 = arith.mulf %75, %76 : vector<7x128xf32>
    %78 = vector.broadcast %13 : vector<1x128xf32> to vector<7x128xf32>
    %79 = arith.addf %77, %78 : vector<7x128xf32>
    %cst_57 = arith.constant 0.000000e+00 : f32
    %80 = vector.broadcast %cst_57 : f32 to vector<7x128xf32>
    %81 = arith.maximumf %79, %80 : vector<7x128xf32>
    %82 = arith.addf %81, %0 : vector<7x128xf32>
    %83 = arith.truncf %47 : vector<8x128xf32> to vector<8x128xbf16>
    %cst_58 = arith.constant dense<0.000000e+00> : vector<8x128xf32>
    %84 = tpu.matmul %83, %14, %cst_58 {dimension_numbers = #tpu.dot_dimension_numbers<[1], [0], [0], [1], [0, 0, 1, 1], [], []>} : vector<8x128xbf16>, vector<128x128xbf16>, vector<8x128xf32> -> vector<8x128xf32>
    %cst_59 = arith.constant dense<0.000000e+00> : vector<128xf32>
    %85 = vector.multi_reduction <add>, %84, %cst_59 [0] : vector<8x128xf32> to vector<128xf32>
    %86 = vector.shape_cast %85 : vector<128xf32> to vector<1x128xf32>
    %cst_60 = arith.constant 8.000000e+00 : f32
    %87 = vector.broadcast %cst_60 : f32 to vector<1x128xf32>
    %88 = arith.divf %86, %87 : vector<1x128xf32>
    %89 = vector.broadcast %88 : vector<1x128xf32> to vector<8x128xf32>
    %90 = arith.subf %84, %89 : vector<8x128xf32>
    %91 = arith.mulf %90, %90 : vector<8x128xf32>
    %cst_61 = arith.constant dense<0.000000e+00> : vector<128xf32>
    %92 = vector.multi_reduction <add>, %91, %cst_61 [0] : vector<8x128xf32> to vector<128xf32>
    %93 = vector.shape_cast %92 : vector<128xf32> to vector<1x128xf32>
    %cst_62 = arith.constant 8.000000e+00 : f32
    %94 = vector.broadcast %cst_62 : f32 to vector<1x128xf32>
    %95 = arith.divf %93, %94 : vector<1x128xf32>
    %96 = vector.broadcast %88 : vector<1x128xf32> to vector<8x128xf32>
    %97 = arith.subf %84, %96 : vector<8x128xf32>
    %cst_63 = arith.constant 9.99999974E-6 : f32
    %98 = vector.broadcast %cst_63 : f32 to vector<1x128xf32>
    %99 = arith.addf %95, %98 : vector<1x128xf32>
    %100 = math.rsqrt %99 : vector<1x128xf32>
    %101 = vector.broadcast %100 : vector<1x128xf32> to vector<8x128xf32>
    %102 = arith.mulf %97, %101 : vector<8x128xf32>
    %103 = vector.broadcast %15 : vector<1x128xf32> to vector<8x128xf32>
    %104 = arith.mulf %102, %103 : vector<8x128xf32>
    %105 = vector.broadcast %16 : vector<1x128xf32> to vector<8x128xf32>
    %106 = arith.addf %104, %105 : vector<8x128xf32>
    %cst_64 = arith.constant 0.000000e+00 : f32
    %107 = vector.broadcast %cst_64 : f32 to vector<8x128xf32>
    %108 = arith.maximumf %106, %107 : vector<8x128xf32>
    %cst_65 = arith.constant 0.000000e+00 : f32
    %109 = vector.broadcast %cst_65 : f32 to vector<8x128xf32>
    %110 = arith.subf %109, %108 : vector<8x128xf32>
    %111 = arith.addf %110, %47 : vector<8x128xf32>
    %cst_66 = arith.constant dense<0.000000e+00> : vector<18x128xf32>
    %112 = tpu.matmul %2, %111, %cst_66 {dimension_numbers = #tpu.dot_dimension_numbers<[1], [0], [0], [1], [0, 0, 1, 1], [], []>} : vector<18x8xf32>, vector<8x128xf32>, vector<18x128xf32> -> vector<18x128xf32>
    %113 = arith.addf %112, %3 : vector<18x128xf32>
    %cst_67 = arith.constant dense<0.000000e+00> : vector<18x128xf32>
    %114 = tpu.matmul %4, %82, %cst_67 {dimension_numbers = #tpu.dot_dimension_numbers<[1], [0], [0], [1], [0, 0, 1, 1], [], []>} : vector<18x7xf32>, vector<7x128xf32>, vector<18x128xf32> -> vector<18x128xf32>
    %115 = tpu.concatenate %114, %113 in 1 : vector<18x128xf32>, vector<18x128xf32> -> vector<18x256xf32>
    %116 = arith.truncf %115 : vector<18x256xf32> to vector<18x256xbf16>
    %cst_68 = arith.constant dense<0.000000e+00> : vector<18x128xf32>
    %117 = tpu.matmul %116, %18, %cst_68 {dimension_numbers = #tpu.dot_dimension_numbers<[1], [0], [0], [1], [0, 0, 1, 1], [], []>} : vector<18x256xbf16>, vector<256x128xbf16>, vector<18x128xf32> -> vector<18x128xf32>
    %cst_69 = arith.constant dense<0.000000e+00> : vector<7x128xf32>
    %118 = tpu.matmul %5, %117, %cst_69 {dimension_numbers = #tpu.dot_dimension_numbers<[1], [0], [0], [1], [0, 0, 1, 1], [], []>} : vector<7x18xf32>, vector<18x128xf32>, vector<7x128xf32> -> vector<7x128xf32>
    %119 = arith.truncf %82 : vector<7x128xf32> to vector<7x128xbf16>
    %cst_70 = arith.constant dense<0.000000e+00> : vector<7x128xf32>
    %120 = tpu.matmul %119, %17, %cst_70 {dimension_numbers = #tpu.dot_dimension_numbers<[1], [0], [0], [1], [0, 0, 1, 1], [], []>} : vector<7x128xbf16>, vector<128x128xbf16>, vector<7x128xf32> -> vector<7x128xf32>
    %121 = arith.addf %120, %118 : vector<7x128xf32>
    %cst_71 = arith.constant dense<0.000000e+00> : vector<128xf32>
    %122 = vector.multi_reduction <add>, %121, %cst_71 [0] : vector<7x128xf32> to vector<128xf32>
    %123 = vector.shape_cast %122 : vector<128xf32> to vector<1x128xf32>
    %cst_72 = arith.constant 7.000000e+00 : f32
    %124 = vector.broadcast %cst_72 : f32 to vector<1x128xf32>
    %125 = arith.divf %123, %124 : vector<1x128xf32>
    %126 = vector.broadcast %125 : vector<1x128xf32> to vector<7x128xf32>
    %127 = arith.subf %121, %126 : vector<7x128xf32>
    %128 = arith.mulf %127, %127 : vector<7x128xf32>
    %cst_73 = arith.constant dense<0.000000e+00> : vector<128xf32>
    %129 = vector.multi_reduction <add>, %128, %cst_73 [0] : vector<7x128xf32> to vector<128xf32>
    %130 = vector.shape_cast %129 : vector<128xf32> to vector<1x128xf32>
    %cst_74 = arith.constant 7.000000e+00 : f32
    %131 = vector.broadcast %cst_74 : f32 to vector<1x128xf32>
    %132 = arith.divf %130, %131 : vector<1x128xf32>
    %133 = vector.broadcast %125 : vector<1x128xf32> to vector<7x128xf32>
    %134 = arith.subf %121, %133 : vector<7x128xf32>
    %cst_75 = arith.constant 9.99999974E-6 : f32
    %135 = vector.broadcast %cst_75 : f32 to vector<1x128xf32>
    %136 = arith.addf %132, %135 : vector<1x128xf32>
    %137 = math.rsqrt %136 : vector<1x128xf32>
    %138 = vector.broadcast %137 : vector<1x128xf32> to vector<7x128xf32>
    %139 = arith.mulf %134, %138 : vector<7x128xf32>
    %140 = vector.broadcast %19 : vector<1x128xf32> to vector<7x128xf32>
    %141 = arith.mulf %139, %140 : vector<7x128xf32>
    %142 = vector.broadcast %20 : vector<1x128xf32> to vector<7x128xf32>
    %143 = arith.addf %141, %142 : vector<7x128xf32>
    %cst_76 = arith.constant 0.000000e+00 : f32
    %144 = vector.broadcast %cst_76 : f32 to vector<7x128xf32>
    %145 = arith.maximumf %143, %144 : vector<7x128xf32>
    %cst_77 = arith.constant 0.000000e+00 : f32
    %146 = vector.broadcast %cst_77 : f32 to vector<7x128xf32>
    %147 = arith.subf %146, %145 : vector<7x128xf32>
    %148 = arith.addf %147, %82 : vector<7x128xf32>
    %cst_78 = arith.constant dense<0.000000e+00> : vector<2x128xf32>
    %149 = tpu.matmul %6, %148, %cst_78 {dimension_numbers = #tpu.dot_dimension_numbers<[1], [0], [0], [1], [0, 0, 1, 1], [], []>} : vector<2x7xf32>, vector<7x128xf32>, vector<2x128xf32> -> vector<2x128xf32>
    %c0_79 = arith.constant 0 : index
    %c0_80 = arith.constant 0 : index
    %150 = vector.load %arg21[%c0_79, %c0_80] : memref<7x128xf32, #tpu.memory_space<vmem>>, vector<7x128xf32>
    tpu.vector_store %arg21[%c0_79, %c0_80], %148 {strides = array<i32>} : memref<7x128xf32, #tpu.memory_space<vmem>>, vector<7x128xf32>,
    %c0_81 = arith.constant 0 : index
    %c0_82 = arith.constant 0 : index
    %151 = vector.load %arg22[%c0_81, %c0_82] : memref<8x128xf32, #tpu.memory_space<vmem>>, vector<8x128xf32>
    tpu.vector_store %arg22[%c0_81, %c0_82], %111 {strides = array<i32>} : memref<8x128xf32, #tpu.memory_space<vmem>>, vector<8x128xf32>,
    %c0_83 = arith.constant 0 : index
    %c0_84 = arith.constant 0 : index
    %152 = vector.load %arg23[%c0_83, %c0_84] : memref<18x128xf32, #tpu.memory_space<vmem>>, vector<18x128xf32>
    tpu.vector_store %arg23[%c0_83, %c0_84], %113 {strides = array<i32>} : memref<18x128xf32, #tpu.memory_space<vmem>>, vector<18x128xf32>,
    %c0_85 = arith.constant 0 : index
    %c0_86 = arith.constant 0 : index
    %153 = vector.load %arg24[%c0_85, %c0_86] : memref<2x128xf32, #tpu.memory_space<vmem>>, vector<2x128xf32>
    tpu.vector_store %arg24[%c0_85, %c0_86], %149 {strides = array<i32>} : memref<2x128xf32, #tpu.memory_space<vmem>>, vector<2x128xf32>,
    return
  }
}

</mosaic_0001>

<llo_original>
// kernel: tpu_custom_call.1
$region0: #{tpu_custom_call.1}
  #allocation0 [shape = 'u32[]', space=smem, size = 0x4, offset = 0x4, fixed_abs, tag = 'smem constant byte address 0x4 - core index']
  #allocation1 [shape = 'u32[144,128]{1,0:T(1,128)}', space=vmem, size = 0x12000, scoped, tag = 'internal scratch']
  %s0 = inlined_call_operand.vmem [shape: f32[7,128], index: 0, kind: input, shape index: {}]
  %s1 = inlined_call_operand.hbm [shape: f32[8,128], index: 1, kind: input, shape index: {}]
  %s2 = inlined_call_operand.vmem [shape: f32[18,8], index: 2, kind: input, shape index: {}]
  %s3 = inlined_call_operand.hbm [shape: f32[18,128], index: 3, kind: input, shape index: {}]
  %s4 = inlined_call_operand.vmem [shape: f32[18,7], index: 4, kind: input, shape index: {}]
  %s5 = inlined_call_operand.hbm [shape: f32[7,18], index: 5, kind: input, shape index: {}]
  %s6 = inlined_call_operand.vmem [shape: f32[2,7], index: 6, kind: input, shape index: {}]
  %s7 = inlined_call_operand.vmem [shape: bf16[128,128], index: 7, kind: input, shape index: {}]
  %s8 = inlined_call_operand.vmem [shape: f32[1,128], index: 8, kind: input, shape index: {}]
  %s9 = inlined_call_operand.vmem [shape: f32[1,128], index: 9, kind: input, shape index: {}]
  %s10 = inlined_call_operand.hbm [shape: bf16[128,128], index: 10, kind: input, shape index: {}]
  %s11 = inlined_call_operand.hbm [shape: bf16[256,128], index: 11, kind: input, shape index: {}]
  %s12 = inlined_call_operand.vmem [shape: f32[1,128], index: 12, kind: input, shape index: {}]
  %s13 = inlined_call_operand.vmem [shape: f32[1,128], index: 13, kind: input, shape index: {}]
  %s14 = inlined_call_operand.hbm [shape: bf16[128,128], index: 14, kind: input, shape index: {}]
  %s15 = inlined_call_operand.vmem [shape: f32[1,128], index: 15, kind: input, shape index: {}]
  %s16 = inlined_call_operand.vmem [shape: f32[1,128], index: 16, kind: input, shape index: {}]
  %s17 = inlined_call_operand.hbm [shape: bf16[128,128], index: 17, kind: input, shape index: {}]
  %s18 = inlined_call_operand.hbm [shape: bf16[256,128], index: 18, kind: input, shape index: {}]
  %s19 = inlined_call_operand.vmem [shape: f32[1,128], index: 19, kind: input, shape index: {}]
  %s20 = inlined_call_operand.vmem [shape: f32[1,128], index: 20, kind: input, shape index: {}]
  %s21 = inlined_call_operand.hbm [shape: f32[7,128], index: 21, kind: output, shape index: {0}]
  %s22 = inlined_call_operand.hbm [shape: f32[8,128], index: 22, kind: output, shape index: {1}]
  %s23 = inlined_call_operand.hbm [shape: f32[18,128], index: 23, kind: output, shape index: {2}]
  %s24 = inlined_call_operand.hbm [shape: f32[2,128], index: 24, kind: output, shape index: {3}]
  %25 = xla_tuple %s21, %s22, %s23, %s24
  %s26 = sld [smem:[#allocation0]]
  $region150: #{tpu_custom_call.1} parent=0
    _
  %s28 = ssub.s32 1, %s26
  %s29 = scalar_select 0, %s28, %s26
  $region1: #{tpu_custom_call.1} parent=0
    #allocation2 [shape = 'u8[4096]{0}', space=vmem, size = 0x1000, scoped, tag = 'input window, operand 1, single buffered']
    #allocation3 [shape = 's32[1]{0}', space=sflag, size = 0x4, scoped, tag = 'scoped memory for tpu_custom_call.1']
    #allocation4 [shape = 's32[1]{0}', space=sflag, size = 0x4, scoped, tag = 'scoped memory for tpu_custom_call.1']
    #allocation5 [shape = 'u8[12288]{0}', space=vmem, size = 0x3000, scoped, tag = 'input window, operand 3, single buffered']
    #allocation6 [shape = 's32[1]{0}', space=sflag, size = 0x4, scoped, tag = 'scoped memory for tpu_custom_call.1']
    #allocation7 [shape = 'u8[4096]{0}', space=vmem, size = 0x1000, scoped, tag = 'input window, operand 5, single buffered']
    #allocation8 [shape = 'u8[32768]{0}', space=vmem, size = 0x8000, scoped, tag = 'input window, operand 10, single buffered']
    #allocation9 [shape = 's32[1]{0}', space=sflag, size = 0x4, scoped, tag = 'scoped memory for tpu_custom_call.1']
    #allocation10 [shape = 'u8[65536]{0}', space=vmem, size = 0x10000, scoped, tag = 'input window, operand 11, single buffered']
    #allocation11 [shape = 'u8[32768]{0}', space=vmem, size = 0x8000, scoped, tag = 'input window, operand 14, single buffered']
    #allocation12 [shape = 's32[1]{0}', space=sflag, size = 0x4, scoped, tag = 'scoped memory for tpu_custom_call.1']
    #allocation13 [shape = 'u8[32768]{0}', space=vmem, size = 0x8000, scoped, tag = 'input window, operand 17, single buffered']
    #allocation14 [shape = 'u8[65536]{0}', space=vmem, size = 0x10000, scoped, tag = 'input window, operand 18, single buffered']
    #allocation15 [shape = 's32[1]{0}', space=sflag, size = 0x4, scoped, tag = 'scoped memory for tpu_custom_call.1']
    #allocation16 [shape = 'u8[4096]{0}', space=vmem, size = 0x1000, scoped, tag = 'output window, operand 0, single buffered']
    #allocation17 [shape = 'u8[4096]{0}', space=vmem, size = 0x1000, scoped, tag = 'output window, operand 1, single buffered']
    #allocation18 [shape = 's32[1]{0}', space=sflag, size = 0x4, scoped, tag = 'scoped memory for tpu_custom_call.1']
    #allocation19 [shape = 'u8[12288]{0}', space=vmem, size = 0x3000, scoped, tag = 'output window, operand 2, single buffered']
    #allocation20 [shape = 'u8[1024]{0}', space=vmem, size = 0x400, scoped, tag = 'output window, operand 3, single buffered']
    #allocation21 [shape = 's32[1]{0}', space=sflag, size = 0x4, scoped, tag = 'scoped memory for tpu_custom_call.1']
    %30 = vsyncpa [#allocation3], 0
    %31 = vsyncpa [#allocation6], 0
    %32 = vsyncpa [#allocation9], 0
    %33 = vsyncpa [#allocation12], 0
    %34 = vsyncpa [#allocation15], 0
    %35 = vsyncpa [#allocation4], 0
    %36 = vsyncpa [#allocation18], 0
    %37 = vsyncpa [#allocation21], 0
    // Predicated region
    $region2: #{tpu_custom_call.1} parent=1 // pred_check
      _
    $region3: #{tpu_custom_call.1} parent=1 // pred_check_branch
      %39 = sbr.rel (0) target = $region5
    $region4: #{tpu_custom_call.1} parent=1 // pred_region
      _
    $region5: #{tpu_custom_call.1} parent=1 // pred_fallthru
      _
    // Predicated region
    $region6: #{tpu_custom_call.1} parent=1 // pred_check
      _
    $region7: #{tpu_custom_call.1} parent=1 // pred_check_branch
      %41 = sbr.rel (0) target = $region9
    $region8: #{tpu_custom_call.1} parent=1 // pred_region
      %s43 = ssub.s32 128, 128
      %44 = vsyncadd [#allocation3], %s43
      %s46 = sshll.u32 [#allocation2], 4
      %s47 = int_to_ptr.vmem [resolvable:$true] %s46
      %49 = dma.hbm_to_vmem [thread:$0]  %s1, 128, %s47, [#allocation3]
    $region9: #{tpu_custom_call.1} parent=1 // pred_fallthru
      _
    // Predicated region
    $region10: #{tpu_custom_call.1} parent=1 // pred_check
      _
    $region11: #{tpu_custom_call.1} parent=1 // pred_check_branch
      %51 = sbr.rel (0) target = $region13
    $region12: #{tpu_custom_call.1} parent=1 // pred_region
      _
    $region13: #{tpu_custom_call.1} parent=1 // pred_fallthru
      _
    // Predicated region
    $region14: #{tpu_custom_call.1} parent=1 // pred_check
      _
    $region15: #{tpu_custom_call.1} parent=1 // pred_check_branch
      %53 = sbr.rel (0) target = $region17
    $region16: #{tpu_custom_call.1} parent=1 // pred_region
      %s55 = ssub.s32 384, 384
      %56 = vsyncadd [#allocation6], %s55
      %s57 = sshll.u32 [#allocation5], 4
      %s58 = int_to_ptr.vmem [resolvable:$true] %s57
      %63 = dma.hbm_to_vmem [thread:$0]  %s3, 384, %s58, [#allocation6], 128, 128, 8
    $region17: #{tpu_custom_call.1} parent=1 // pred_fallthru
      _
    // Predicated region
    $region18: #{tpu_custom_call.1} parent=1 // pred_check
      _
    $region19: #{tpu_custom_call.1} parent=1 // pred_check_branch
      %65 = sbr.rel (0) target = $region21
    $region20: #{tpu_custom_call.1} parent=1 // pred_region
      _
    $region21: #{tpu_custom_call.1} parent=1 // pred_fallthru
      _
    // Predicated region
    $region22: #{tpu_custom_call.1} parent=1 // pred_check
      _
    $region23: #{tpu_custom_call.1} parent=1 // pred_check_branch
      %67 = sbr.rel (0) target = $region25
    $region24: #{tpu_custom_call.1} parent=1 // pred_region
      %s69 = ssub.s32 128, 128
      %70 = vsyncadd [#allocation6], %s69
      %s72 = sshll.u32 [#allocation7], 4
      %s73 = int_to_ptr.vmem [resolvable:$true] %s72
      %75 = dma.hbm_to_vmem [thread:$0]  %s5, 128, %s73, [#allocation6]
    $region25: #{tpu_custom_call.1} parent=1 // pred_fallthru
      _
    // Predicated region
    $region26: #{tpu_custom_call.1} parent=1 // pred_check
      _
    $region27: #{tpu_custom_call.1} parent=1 // pred_check_branch
      %77 = sbr.rel (0) target = $region29
    $region28: #{tpu_custom_call.1} parent=1 // pred_region
      _
    $region29: #{tpu_custom_call.1} parent=1 // pred_fallthru
      _
    // Predicated region
    $region30: #{tpu_custom_call.1} parent=1 // pred_check
      _
    $region31: #{tpu_custom_call.1} parent=1 // pred_check_branch
      %79 = sbr.rel (0) target = $region33
    $region32: #{tpu_custom_call.1} parent=1 // pred_region
      _
    $region33: #{tpu_custom_call.1} parent=1 // pred_fallthru
      _
    // Predicated region
    $region34: #{tpu_custom_call.1} parent=1 // pred_check
      _
    $region35: #{tpu_custom_call.1} parent=1 // pred_check_branch
      %81 = sbr.rel (0) target = $region37
    $region36: #{tpu_custom_call.1} parent=1 // pred_region
      _
    $region37: #{tpu_custom_call.1} parent=1 // pred_fallthru
      _
    // Predicated region
    $region38: #{tpu_custom_call.1} parent=1 // pred_check
      _
    $region39: #{tpu_custom_call.1} parent=1 // pred_check_branch
      %83 = sbr.rel (0) target = $region41
    $region40: #{tpu_custom_call.1} parent=1 // pred_region
      _
    $region41: #{tpu_custom_call.1} parent=1 // pred_fallthru
      _
    // Predicated region
    $region42: #{tpu_custom_call.1} parent=1 // pred_check
      _
    $region43: #{tpu_custom_call.1} parent=1 // pred_check_branch
      %85 = sbr.rel (0) target = $region45
    $region44: #{tpu_custom_call.1} parent=1 // pred_region
      %s87 = ssub.s32 1024, 1024
      %88 = vsyncadd [#allocation9], %s87
      %s89 = sshll.u32 [#allocation8], 4
      %s90 = int_to_ptr.vmem [resolvable:$true] %s89
      %95 = dma.hbm_to_vmem [thread:$0]  %s10, 1024, %s90, [#allocation9], 64, 64, 4
    $region45: #{tpu_custom_call.1} parent=1 // pred_fallthru
      _
    // Predicated region
    $region46: #{tpu_custom_call.1} parent=1 // pred_check
      _
    $region47: #{tpu_custom_call.1} parent=1 // pred_check_branch
      %97 = sbr.rel (0) target = $region49
    $region48: #{tpu_custom_call.1} parent=1 // pred_region
      %s99 = ssub.s32 2048, 2048
      %100 = vsyncadd [#allocation9], %s99
      %s101 = sshll.u32 [#allocation10], 4
      %s102 = int_to_ptr.vmem [resolvable:$true] %s101
      %107 = dma.hbm_to_vmem [thread:$0]  %s11, 2048, %s102, [#allocation9], 64, 64, 4
    $region49: #{tpu_custom_call.1} parent=1 // pred_fallthru
      _
    // Predicated region
    $region50: #{tpu_custom_call.1} parent=1 // pred_check
      _
    $region51: #{tpu_custom_call.1} parent=1 // pred_check_branch
      %109 = sbr.rel (0) target = $region53
    $region52: #{tpu_custom_call.1} parent=1 // pred_region
      _
    $region53: #{tpu_custom_call.1} parent=1 // pred_fallthru
      _
    // Predicated region
    $region54: #{tpu_custom_call.1} parent=1 // pred_check
      _
    $region55: #{tpu_custom_call.1} parent=1 // pred_check_branch
      %111 = sbr.rel (0) target = $region57
    $region56: #{tpu_custom_call.1} parent=1 // pred_region
      _
    $region57: #{tpu_custom_call.1} parent=1 // pred_fallthru
      _
    // Predicated region
    $region58: #{tpu_custom_call.1} parent=1 // pred_check
      _
    $region59: #{tpu_custom_call.1} parent=1 // pred_check_branch
      %113 = sbr.rel (0) target = $region61
    $region60: #{tpu_custom_call.1} parent=1 // pred_region
      %s115 = ssub.s32 1024, 1024
      %116 = vsyncadd [#allocation12], %s115
      %s117 = sshll.u32 [#allocation11], 4
      %s118 = int_to_ptr.vmem [resolvable:$true] %s117
      %123 = dma.hbm_to_vmem [thread:$0]  %s14, 1024, %s118, [#allocation12], 64, 64, 4
    $region61: #{tpu_custom_call.1} parent=1 // pred_fallthru
      _
    // Predicated region
    $region62: #{tpu_custom_call.1} parent=1 // pred_check
      _
    $region63: #{tpu_custom_call.1} parent=1 // pred_check_branch
      %125 = sbr.rel (0) target = $region65
    $region64: #{tpu_custom_call.1} parent=1 // pred_region
      _
    $region65: #{tpu_custom_call.1} parent=1 // pred_fallthru
      _
    // Predicated region
    $region66: #{tpu_custom_call.1} parent=1 // pred_check
      _
    $region67: #{tpu_custom_call.1} parent=1 // pred_check_branch
      %127 = sbr.rel (0) target = $region69
    $region68: #{tpu_custom_call.1} parent=1 // pred_region
      _
    $region69: #{tpu_custom_call.1} parent=1 // pred_fallthru
      _
    // Predicated region
    $region70: #{tpu_custom_call.1} parent=1 // pred_check
      _
    $region71: #{tpu_custom_call.1} parent=1 // pred_check_branch
      %129 = sbr.rel (0) target = $region73
    $region72: #{tpu_custom_call.1} parent=1 // pred_region
      %s131 = ssub.s32 1024, 1024
      %132 = vsyncadd [#allocation12], %s131
      %s133 = sshll.u32 [#allocation13], 4
      %s134 = int_to_ptr.vmem [resolvable:$true] %s133
      %139 = dma.hbm_to_vmem [thread:$0]  %s17, 1024, %s134, [#allocation12], 64, 64, 4
    $region73: #{tpu_custom_call.1} parent=1 // pred_fallthru
      _
    // Predicated region
    $region74: #{tpu_custom_call.1} parent=1 // pred_check
      _
    $region75: #{tpu_custom_call.1} parent=1 // pred_check_branch
      %141 = sbr.rel (0) target = $region77
    $region76: #{tpu_custom_call.1} parent=1 // pred_region
      %s143 = ssub.s32 2048, 2048
      %144 = vsyncadd [#allocation15], %s143
      %s145 = sshll.u32 [#allocation14], 4
      %s146 = int_to_ptr.vmem [resolvable:$true] %s145
      %151 = dma.hbm_to_vmem [thread:$0]  %s18, 2048, %s146, [#allocation15], 64, 64, 4
    $region77: #{tpu_custom_call.1} parent=1 // pred_fallthru
      _
    // Predicated region
    $region78: #{tpu_custom_call.1} parent=1 // pred_check
      _
    $region79: #{tpu_custom_call.1} parent=1 // pred_check_branch
      %153 = sbr.rel (0) target = $region81
    $region80: #{tpu_custom_call.1} parent=1 // pred_region
      _
    $region81: #{tpu_custom_call.1} parent=1 // pred_fallthru
      _
    // Predicated region
    $region82: #{tpu_custom_call.1} parent=1 // pred_check
      _
    $region83: #{tpu_custom_call.1} parent=1 // pred_check_branch
      %155 = sbr.rel (0) target = $region85
    $region84: #{tpu_custom_call.1} parent=1 // pred_region
      _
    $region85: #{tpu_custom_call.1} parent=1 // pred_fallthru
      _
    // Predicated region
    $region86: #{tpu_custom_call.1} parent=1 // pred_check
      _
    $region87: #{tpu_custom_call.1} parent=1 // pred_check_branch
      %157 = sbr.rel (0) target = $region89
    $region88: #{tpu_custom_call.1} parent=1 // pred_region
      %158 = dma.done [#allocation3], 128
    $region89: #{tpu_custom_call.1} parent=1 // pred_fallthru
      _
    // Predicated region
    $region90: #{tpu_custom_call.1} parent=1 // pred_check
      _
    $region91: #{tpu_custom_call.1} parent=1 // pred_check_branch
      %160 = sbr.rel (0) target = $region93
    $region92: #{tpu_custom_call.1} parent=1 // pred_region
      %161 = dma.done [#allocation6], 384
    $region93: #{tpu_custom_call.1} parent=1 // pred_fallthru
      _
    // Predicated region
    $region94: #{tpu_custom_call.1} parent=1 // pred_check
      _
    $region95: #{tpu_custom_call.1} parent=1 // pred_check_branch
      %163 = sbr.rel (0) target = $region97
    $region96: #{tpu_custom_call.1} parent=1 // pred_region
      %164 = dma.done [#allocation6], 128
    $region97: #{tpu_custom_call.1} parent=1 // pred_fallthru
      _
    // Predicated region
    $region98: #{tpu_custom_call.1} parent=1 // pred_check
      _
    $region99: #{tpu_custom_call.1} parent=1 // pred_check_branch
      %166 = sbr.rel (0) target = $region101
    $region100: #{tpu_custom_call.1} parent=1 // pred_region
      %167 = dma.done [#allocation9], 1024
    $region101: #{tpu_custom_call.1} parent=1 // pred_fallthru
      _
    // Predicated region
    $region102: #{tpu_custom_call.1} parent=1 // pred_check
      _
    $region103: #{tpu_custom_call.1} parent=1 // pred_check_branch
      %169 = sbr.rel (0) target = $region105
    $region104: #{tpu_custom_call.1} parent=1 // pred_region
      %170 = dma.done [#allocation9], 2048
    $region105: #{tpu_custom_call.1} parent=1 // pred_fallthru
      _
    // Predicated region
    $region106: #{tpu_custom_call.1} parent=1 // pred_check
      _
    $region107: #{tpu_custom_call.1} parent=1 // pred_check_branch
      %172 = sbr.rel (0) target = $region109
    $region108: #{tpu_custom_call.1} parent=1 // pred_region
      %173 = dma.done [#allocation12], 1024
    $region109: #{tpu_custom_call.1} parent=1 // pred_fallthru
      _
    // Predicated region
    $region110: #{tpu_custom_call.1} parent=1 // pred_check
      _
    $region111: #{tpu_custom_call.1} parent=1 // pred_check_branch
      %175 = sbr.rel (0) target = $region113
    $region112: #{tpu_custom_call.1} parent=1 // pred_region
      %176 = dma.done [#allocation12], 1024
    $region113: #{tpu_custom_call.1} parent=1 // pred_fallthru
      _
    // Predicated region
    $region114: #{tpu_custom_call.1} parent=1 // pred_check
      _
    $region115: #{tpu_custom_call.1} parent=1 // pred_check_branch
      %178 = sbr.rel (0) target = $region117
    $region116: #{tpu_custom_call.1} parent=1 // pred_region
      %179 = dma.done [#allocation15], 2048
    $region117: #{tpu_custom_call.1} parent=1 // pred_fallthru
      _
    %v181 = vld [vmem:[%s0] sm:$0x7f]
    %v182 = vld [vmem:[#allocation2] sm:$0xff]
    %v183 = vld [vmem:[%s2] sm:$0xff]
    %v184 = vld [vmem:[%s2 + $0x8] sm:$0xff]
    %v185 = vld [vmem:[%s2 + $0x10] sm:$0x3]
    %v186 = vld [vmem:[#allocation5] sm:$0xff]
    %v187 = vld [vmem:[#allocation5 + $0x8] sm:$0xff]
    %v188 = vld [vmem:[#allocation5 + $0x10] sm:$0x3]
    %v189 = vld [vmem:[%s4] sm:$0xff]
    %v190 = vld [vmem:[%s4 + $0x8] sm:$0xff]
    %v191 = vld [vmem:[%s4 + $0x10] sm:$0x3]
    %v192 = vld [vmem:[#allocation7] sm:$0x7f]
    %v193 = vld [vmem:[%s6] sm:$0x3]
    %v194 = vld [vmem:[%s7] sm:$0xf]
    %v195 = vld [vmem:[%s7 + $0x4] sm:$0xf]
    %v196 = vld [vmem:[%s7 + $0x8] sm:$0xf]
    %v197 = vld [vmem:[%s7 + $0xc] sm:$0xf]
    %v198 = vld [vmem:[%s7 + $0x10] sm:$0xf]
    %v199 = vld [vmem:[%s7 + $0x14] sm:$0xf]
    %v200 = vld [vmem:[%s7 + $0x18] sm:$0xf]
    %v201 = vld [vmem:[%s7 + $0x1c] sm:$0xf]
    %v202 = vld [vmem:[%s7 + $0x20] sm:$0xf]
    %v203 = vld [vmem:[%s7 + $0x24] sm:$0xf]
    %v204 = vld [vmem:[%s7 + $0x28] sm:$0xf]
    %v205 = vld [vmem:[%s7 + $0x2c] sm:$0xf]
    %v206 = vld [vmem:[%s7 + $0x30] sm:$0xf]
    %v207 = vld [vmem:[%s7 + $0x34] sm:$0xf]
    %v208 = vld [vmem:[%s7 + $0x38] sm:$0xf]
    %v209 = vld [vmem:[%s7 + $0x3c] sm:$0xf]
    %v210 = vld [vmem:[%s8] sm:$0x1]
    %v211 = vld [vmem:[%s9] sm:$0x1]
    %v212 = vld [vmem:[#allocation8] sm:$0xf]
    %v213 = vld [vmem:[#allocation8 + $0x4] sm:$0xf]
    %v214 = vld [vmem:[#allocation8 + $0x8] sm:$0xf]
    %v215 = vld [vmem:[#allocation8 + $0xc] sm:$0xf]
    %v216 = vld [vmem:[#allocation8 + $0x10] sm:$0xf]
    %v217 = vld [vmem:[#allocation8 + $0x14] sm:$0xf]
    %v218 = vld [vmem:[#allocation8 + $0x18] sm:$0xf]
    %v219 = vld [vmem:[#allocation8 + $0x1c] sm:$0xf]
    %v220 = vld [vmem:[#allocation8 + $0x20] sm:$0xf]
    %v221 = vld [vmem:[#allocation8 + $0x24] sm:$0xf]
    %v222 = vld [vmem:[#allocation8 + $0x28] sm:$0xf]
    %v223 = vld [vmem:[#allocation8 + $0x2c] sm:$0xf]
    %v224 = vld [vmem:[#allocation8 + $0x30] sm:$0xf]
    %v225 = vld [vmem:[#allocation8 + $0x34] sm:$0xf]
    %v226 = vld [vmem:[#allocation8 + $0x38] sm:$0xf]
    %v227 = vld [vmem:[#allocation8 + $0x3c] sm:$0xf]
    %v228 = vld [vmem:[#allocation10] sm:$0xf]
    %v229 = vld [vmem:[#allocation10 + $0x4] sm:$0xf]
    %v230 = vld [vmem:[#allocation10 + $0x8] sm:$0xf]
    %v231 = vld [vmem:[#allocation10 + $0xc] sm:$0xf]
    %v232 = vld [vmem:[#allocation10 + $0x10] sm:$0xf]
    %v233 = vld [vmem:[#allocation10 + $0x14] sm:$0xf]
    %v234 = vld [vmem:[#allocation10 + $0x18] sm:$0xf]
    %v235 = vld [vmem:[#allocation10 + $0x1c] sm:$0xf]
    %v236 = vld [vmem:[#allocation10 + $0x20] sm:$0xf]
    %v237 = vld [vmem:[#allocation10 + $0x24] sm:$0xf]
    %v238 = vld [vmem:[#allocation10 + $0x28] sm:$0xf]
    %v239 = vld [vmem:[#allocation10 + $0x2c] sm:$0xf]
    %v240 = vld [vmem:[#allocation10 + $0x30] sm:$0xf]
    %v241 = vld [vmem:[#allocation10 + $0x34] sm:$0xf]
    %v242 = vld [vmem:[#allocation10 + $0x38] sm:$0xf]
    %v243 = vld [vmem:[#allocation10 + $0x3c] sm:$0xf]
    %v244 = vld [vmem:[#allocation10 + $0x40] sm:$0xf]
    %v245 = vld [vmem:[#allocation10 + $0x44] sm:$0xf]
    %v246 = vld [vmem:[#allocation10 + $0x48] sm:$0xf]
    %v247 = vld [vmem:[#allocation10 + $0x4c] sm:$0xf]
    %v248 = vld [vmem:[#allocation10 + $0x50] sm:$0xf]
    %v249 = vld [vmem:[#allocation10 + $0x54] sm:$0xf]
    %v250 = vld [vmem:[#allocation10 + $0x58] sm:$0xf]
    %v251 = vld [vmem:[#allocation10 + $0x5c] sm:$0xf]
    %v252 = vld [vmem:[#allocation10 + $0x60] sm:$0xf]
    %v253 = vld [vmem:[#allocation10 + $0x64] sm:$0xf]
    %v254 = vld [vmem:[#allocation10 + $0x68] sm:$0xf]
    %v255 = vld [vmem:[#allocation10 + $0x6c] sm:$0xf]
    %v256 = vld [vmem:[#allocation10 + $0x70] sm:$0xf]
    %v257 = vld [vmem:[#allocation10 + $0x74] sm:$0xf]
    %v258 = vld [vmem:[#allocation10 + $0x78] sm:$0xf]
    %v259 = vld [vmem:[#allocation10 + $0x7c] sm:$0xf]
    %v260 = vld [vmem:[%s12] sm:$0x1]
    %v261 = vld [vmem:[%s13] sm:$0x1]
    %v262 = vld [vmem:[#allocation11] sm:$0xf]
    %v263 = vld [vmem:[#allocation11 + $0x4] sm:$0xf]
    %v264 = vld [vmem:[#allocation11 + $0x8] sm:$0xf]
    %v265 = vld [vmem:[#allocation11 + $0xc] sm:$0xf]
    %v266 = vld [vmem:[#allocation11 + $0x10] sm:$0xf]
    %v267 = vld [vmem:[#allocation11 + $0x14] sm:$0xf]
    %v268 = vld [vmem:[#allocation11 + $0x18] sm:$0xf]
    %v269 = vld [vmem:[#allocation11 + $0x1c] sm:$0xf]
    %v270 = vld [vmem:[#allocation11 + $0x20] sm:$0xf]
    %v271 = vld [vmem:[#allocation11 + $0x24] sm:$0xf]
    %v272 = vld [vmem:[#allocation11 + $0x28] sm:$0xf]
    %v273 = vld [vmem:[#allocation11 + $0x2c] sm:$0xf]
    %v274 = vld [vmem:[#allocation11 + $0x30] sm:$0xf]
    %v275 = vld [vmem:[#allocation11 + $0x34] sm:$0xf]
    %v276 = vld [vmem:[#allocation11 + $0x38] sm:$0xf]
    %v277 = vld [vmem:[#allocation11 + $0x3c] sm:$0xf]
    %v278 = vld [vmem:[%s15] sm:$0x1]
    %v279 = vld [vmem:[%s16] sm:$0x1]
    %v280 = vld [vmem:[#allocation13] sm:$0xf]
    %v281 = vld [vmem:[#allocation13 + $0x4] sm:$0xf]
    %v282 = vld [vmem:[#allocation13 + $0x8] sm:$0xf]
    %v283 = vld [vmem:[#allocation13 + $0xc] sm:$0xf]
    %v284 = vld [vmem:[#allocation13 + $0x10] sm:$0xf]
    %v285 = vld [vmem:[#allocation13 + $0x14] sm:$0xf]
    %v286 = vld [vmem:[#allocation13 + $0x18] sm:$0xf]
    %v287 = vld [vmem:[#allocation13 + $0x1c] sm:$0xf]
    %v288 = vld [vmem:[#allocation13 + $0x20] sm:$0xf]
    %v289 = vld [vmem:[#allocation13 + $0x24] sm:$0xf]
    %v290 = vld [vmem:[#allocation13 + $0x28] sm:$0xf]
    %v291 = vld [vmem:[#allocation13 + $0x2c] sm:$0xf]
    %v292 = vld [vmem:[#allocation13 + $0x30] sm:$0xf]
    %v293 = vld [vmem:[#allocation13 + $0x34] sm:$0xf]
    %v294 = vld [vmem:[#allocation13 + $0x38] sm:$0xf]
    %v295 = vld [vmem:[#allocation13 + $0x3c] sm:$0xf]
    %v296 = vld [vmem:[#allocation14] sm:$0xf]
    %v297 = vld [vmem:[#allocation14 + $0x4] sm:$0xf]
    %v298 = vld [vmem:[#allocation14 + $0x8] sm:$0xf]
    %v299 = vld [vmem:[#allocation14 + $0xc] sm:$0xf]
    %v300 = vld [vmem:[#allocation14 + $0x10] sm:$0xf]
    %v301 = vld [vmem:[#allocation14 + $0x14] sm:$0xf]
    %v302 = vld [vmem:[#allocation14 + $0x18] sm:$0xf]
    %v303 = vld [vmem:[#allocation14 + $0x1c] sm:$0xf]
    %v304 = vld [vmem:[#allocation14 + $0x20] sm:$0xf]
    %v305 = vld [vmem:[#allocation14 + $0x24] sm:$0xf]
    %v306 = vld [vmem:[#allocation14 + $0x28] sm:$0xf]
    %v307 = vld [vmem:[#allocation14 + $0x2c] sm:$0xf]
    %v308 = vld [vmem:[#allocation14 + $0x30] sm:$0xf]
    %v309 = vld [vmem:[#allocation14 + $0x34] sm:$0xf]
    %v310 = vld [vmem:[#allocation14 + $0x38] sm:$0xf]
    %v311 = vld [vmem:[#allocation14 + $0x3c] sm:$0xf]
    %v312 = vld [vmem:[#allocation14 + $0x40] sm:$0xf]
    %v313 = vld [vmem:[#allocation14 + $0x44] sm:$0xf]
    %v314 = vld [vmem:[#allocation14 + $0x48] sm:$0xf]
    %v315 = vld [vmem:[#allocation14 + $0x4c] sm:$0xf]
    %v316 = vld [vmem:[#allocation14 + $0x50] sm:$0xf]
    %v317 = vld [vmem:[#allocation14 + $0x54] sm:$0xf]
    %v318 = vld [vmem:[#allocation14 + $0x58] sm:$0xf]
    %v319 = vld [vmem:[#allocation14 + $0x5c] sm:$0xf]
    %v320 = vld [vmem:[#allocation14 + $0x60] sm:$0xf]
    %v321 = vld [vmem:[#allocation14 + $0x64] sm:$0xf]
    %v322 = vld [vmem:[#allocation14 + $0x68] sm:$0xf]
    %v323 = vld [vmem:[#allocation14 + $0x6c] sm:$0xf]
    %v324 = vld [vmem:[#allocation14 + $0x70] sm:$0xf]
    %v325 = vld [vmem:[#allocation14 + $0x74] sm:$0xf]
    %v326 = vld [vmem:[#allocation14 + $0x78] sm:$0xf]
    %v327 = vld [vmem:[#allocation14 + $0x7c] sm:$0xf]
    %v328 = vld [vmem:[%s19] sm:$0x1]
    %v329 = vld [vmem:[%s20] sm:$0x1]
    %v330 = vpack.c.bf16 %v182, %v182
    %v347 = vunpack.c.l.b16 %v194
    %v348 = vunpack.c.l.b16 %v195
    %v349 = vunpack.c.l.b16 %v196
    %v350 = vunpack.c.l.b16 %v197
    %v351 = vunpack.c.l.b16 %v198
    %v352 = vunpack.c.l.b16 %v199
    %v353 = vunpack.c.l.b16 %v200
    %v354 = vunpack.c.l.b16 %v201
    %v355 = vunpack.c.l.b16 %v202
    %v356 = vunpack.c.l.b16 %v203
    %v357 = vunpack.c.l.b16 %v204
    %v358 = vunpack.c.l.b16 %v205
    %v359 = vunpack.c.l.b16 %v206
    %v360 = vunpack.c.l.b16 %v207
    %v361 = vunpack.c.l.b16 %v208
    %v362 = vunpack.c.l.b16 %v209
    %v363 = vpack.c.b16 %v348, %v347
    %v364 = vpack.c.b16 %v350, %v349
    %v365 = vpack.c.b16 %v352, %v351
    %v366 = vpack.c.b16 %v354, %v353
    %v367 = vpack.c.b16 %v356, %v355
    %v368 = vpack.c.b16 %v358, %v357
    %v369 = vpack.c.b16 %v360, %v359
    %v370 = vpack.c.b16 %v362, %v361
    %379 = vmatprep.subr.bf16.mxu0 0
    %380 = vmatpush1.bf16.msra.mxu0 %v370
    %381 = vmatprep.subr.bf16.mxu0 0
    %382 = vmatpush1.bf16.msra.mxu0 %v369
    %383 = vmatprep.subr.bf16.mxu0 0
    %384 = vmatpush1.bf16.msra.mxu0 %v368
    %385 = vmatprep.subr.bf16.mxu0 0
    %386 = vmatpush1.bf16.msra.mxu0 %v367
    %387 = vmatprep.subr.bf16.mxu0 0
    %388 = vmatpush1.bf16.msra.mxu0 %v366
    %389 = vmatprep.subr.bf16.mxu0 0
    %390 = vmatpush1.bf16.msra.mxu0 %v365
    %391 = vmatprep.subr.bf16.mxu0 0
    %392 = vmatpush1.bf16.msra.mxu0 %v364
    %393 = vmatprep.subr.bf16.mxu0 0
    %394 = vmatpush1.bf16.msra.mxu0 %v363
    %395 = vmatprep.subr.bf16.mxu0 0
    %396 = vmatpush2.bf16.msra.mxu0 0
    %397 = vmatprep.subr.bf16.mxu0 0
    %398 = vmatpush2.bf16.msra.mxu0 0
    %399 = vmatprep.subr.bf16.mxu0 0
    %400 = vmatpush2.bf16.msra.mxu0 0
    %401 = vmatprep.subr.bf16.mxu0 0
    %402 = vmatpush2.bf16.msra.mxu0 0
    %403 = vmatprep.subr.bf16.mxu0 0
    %404 = vmatpush2.bf16.msra.mxu0 0
    %405 = vmatprep.subr.bf16.mxu0 0
    %406 = vmatpush2.bf16.msra.mxu0 0
    %407 = vmatprep.subr.bf16.mxu0 0
    %408 = vmatpush2.bf16.msra.mxu0 0
    %409 = vmatprep.subr.bf16.mxu0 0
    %410 = vmatpush2.bf16.msra.mxu0 0
    %411 = vmatprep.mubr.bf16.mxu0 0
    %412 = vmatmul.mubr.bf16.gmra.mxu0 %v330
    %v413 = vpop.f32.mrf.mxu0
    %v414 = vadd.f32 0.0, %v413
    %v415 = vpop.f32.mrf.mxu0
    %v416 = vpop.f32.mrf.mxu0
    %v417 = vpop.f32.mrf.mxu0
    %418 = vdwg.mxu0
    %v419 = vrot.slane %v414, 4
    %v420 = vadd.f32 %v414, %v419
    %v421 = vrot.slane %v420, 2
    %v422 = vadd.f32 %v420, %v421
    %v423 = vrot.slane %v422, 1
    %v424 = vadd.f32 %v422, %v423
    %v425 = vrcp.pop 8.0
    %v426 = vmul.f32 %v424, %v425
    %v427 = vsub.f32 %v414, %v426
    %v428 = vmul.f32 %v427, %v427
    %v429 = vrot.slane %v428, 4
    %v430 = vadd.f32 %v428, %v429
    %v431 = vrot.slane %v430, 2
    %v432 = vadd.f32 %v430, %v431
    %v433 = vrot.slane %v432, 1
    %v434 = vadd.f32 %v432, %v433
    %v435 = vmul.f32 %v434, %v425
    %v436 = vadd.f32 %v435, 1e-05
    %v437 = vrsqrt.pop %v436
    %v438 = vmul.f32 %v427, %v437
    %v440 = vlaneseq
    %v441 = vshrl.u32 %v440, 7
    %v442 = vsub.s32 0, %v441
    %v443 = vrot.slane %v210, %v442
    %v445 = vmul.f32 %v438, %v443
    %v447 = vlaneseq
    %v448 = vshrl.u32 %v447, 7
    %v449 = vsub.s32 0, %v448
    %v450 = vrot.slane %v211, %v449
    %v452 = vadd.f32 %v445, %v450
    %v453 = vmax.f32 %v452, 0.0
    %v454 = vadd.f32 %v453, %v182
    %vm455 = vcmask 64512
    %v457 = vsel %vm455, %v183, 0
    %v460 = vsel %vm455, %v184, 0
    %v463 = vsel %vm455, %v185, 0
    %465 = vmatprep.subr.mxu0 0.0
    %466 = vmatpush1.msra.mxu0 0.0
    %467 = vmatprep.subr.mxu0 0.0
    %468 = vmatpush1.msra.mxu0 0.0
    %469 = vmatprep.subr.mxu0 0.0
    %470 = vmatpush1.msra.mxu0 0.0
    %471 = vmatprep.subr.mxu0 0.0
    %472 = vmatpush1.msra.mxu0 0.0
    %473 = vmatprep.subr.mxu0 0.0
    %474 = vmatpush1.msra.mxu0 0.0
    %475 = vmatprep.subr.mxu0 0.0
    %476 = vmatpush1.msra.mxu0 0.0
    %477 = vmatprep.subr.mxu0 0.0
    %478 = vmatpush1.msra.mxu0 0.0
    %479 = vmatprep.subr.mxu0 0.0
    %480 = vmatpush1.msra.mxu0 0.0
    %481 = vmatprep.subr.mxu0 0.0
    %482 = vmatpush1.msra.mxu0 0.0
    %483 = vmatprep.subr.mxu0 0.0
    %484 = vmatpush1.msra.mxu0 0.0
    %485 = vmatprep.subr.mxu0 0.0
    %486 = vmatpush1.msra.mxu0 0.0
    %487 = vmatprep.subr.mxu0 0.0
    %488 = vmatpush1.msra.mxu0 0.0
    %489 = vmatprep.subr.mxu0 0.0
    %490 = vmatpush1.msra.mxu0 0.0
    %491 = vmatprep.subr.mxu0 0.0
    %492 = vmatpush1.msra.mxu0 0.0
    %493 = vmatprep.subr.mxu0 0.0
    %494 = vmatpush1.msra.mxu0 0.0
    %495 = vmatprep.subr.mxu0 0.0
    %496 = vmatpush1.msra.mxu0 %v454
    %497 = vmatprep.subr.mxu0 0.0
    %498 = vmatpush2.msra.mxu0 0.0
    %499 = vmatprep.subr.mxu0 0.0
    %500 = vmatpush2.msra.mxu0 0.0
    %501 = vmatprep.subr.mxu0 0.0
    %502 = vmatpush2.msra.mxu0 0.0
    %503 = vmatprep.subr.mxu0 0.0
    %504 = vmatpush2.msra.mxu0 0.0
    %505 = vmatprep.subr.mxu0 0.0
    %506 = vmatpush2.msra.mxu0 0.0
    %507 = vmatprep.subr.mxu0 0.0
    %508 = vmatpush2.msra.mxu0 0.0
    %509 = vmatprep.subr.mxu0 0.0
    %510 = vmatpush2.msra.mxu0 0.0
    %511 = vmatprep.subr.mxu0 0.0
    %512 = vmatpush2.msra.mxu0 0.0
    %513 = vmatprep.subr.mxu0 0.0
    %514 = vmatpush2.msra.mxu0 0.0
    %515 = vmatprep.subr.mxu0 0.0
    %516 = vmatpush2.msra.mxu0 0.0
    %517 = vmatprep.subr.mxu0 0.0
    %518 = vmatpush2.msra.mxu0 0.0
    %519 = vmatprep.subr.mxu0 0.0
    %520 = vmatpush2.msra.mxu0 0.0
    %521 = vmatprep.subr.mxu0 0.0
    %522 = vmatpush2.msra.mxu0 0.0
    %523 = vmatprep.subr.mxu0 0.0
    %524 = vmatpush2.msra.mxu0 0.0
    %525 = vmatprep.subr.mxu0 0.0
    %526 = vmatpush2.msra.mxu0 0.0
    %527 = vmatprep.subr.mxu0 0.0
    %528 = vmatpush2.msra.mxu0 0.0
    %529 = vmatprep.mubr.f32.mxu0 0.0
    %530 = vmatmul.mubr.f32.gmra.mxu0 %v457
    %v531 = vpop.f32.mrf.mxu0
    %v532 = vadd.f32 %v186, %v531
    %v533 = vpop.f32.mrf.mxu0
    %534 = vmatprep.mubr.f32.mxu0 0.0
    %535 = vmatmul.mubr.f32.gmra.mxu0 %v460
    %v536 = vpop.f32.mrf.mxu0
    %v537 = vadd.f32 %v187, %v536
    %v538 = vpop.f32.mrf.mxu0
    %539 = vmatprep.mubr.f32.mxu0 0.0
    %540 = vmatmul.mubr.f32.gmra.mxu0 %v463
    %v541 = vpop.f32.mrf.mxu0
    %v542 = vadd.f32 %v188, %v541
    %v543 = vpop.f32.mrf.mxu0
    %544 = vdwg.mxu0
    %vm545 = vcmask 56320
    %v547 = vsel %vm545, %v189, 0
    %v550 = vsel %vm545, %v190, 0
    %v553 = vsel %vm545, %v191, 0
    %vm555 = vcmask 1046528
    %v557 = vsel %vm555, %v181, 0
    %559 = vmatprep.subr.mxu0 0.0
    %560 = vmatpush1.msra.mxu0 0.0
    %561 = vmatprep.subr.mxu0 0.0
    %562 = vmatpush1.msra.mxu0 0.0
    %563 = vmatprep.subr.mxu0 0.0
    %564 = vmatpush1.msra.mxu0 0.0
    %565 = vmatprep.subr.mxu0 0.0
    %566 = vmatpush1.msra.mxu0 0.0
    %567 = vmatprep.subr.mxu0 0.0
    %568 = vmatpush1.msra.mxu0 0.0
    %569 = vmatprep.subr.mxu0 0.0
    %570 = vmatpush1.msra.mxu0 0.0
    %571 = vmatprep.subr.mxu0 0.0
    %572 = vmatpush1.msra.mxu0 0.0
    %573 = vmatprep.subr.mxu0 0.0
    %574 = vmatpush1.msra.mxu0 0.0
    %575 = vmatprep.subr.mxu0 0.0
    %576 = vmatpush1.msra.mxu0 0.0
    %577 = vmatprep.subr.mxu0 0.0
    %578 = vmatpush1.msra.mxu0 0.0
    %579 = vmatprep.subr.mxu0 0.0
    %580 = vmatpush1.msra.mxu0 0.0
    %581 = vmatprep.subr.mxu0 0.0
    %582 = vmatpush1.msra.mxu0 0.0
    %583 = vmatprep.subr.mxu0 0.0
    %584 = vmatpush1.msra.mxu0 0.0
    %585 = vmatprep.subr.mxu0 0.0
    %586 = vmatpush1.msra.mxu0 0.0
    %587 = vmatprep.subr.mxu0 0.0
    %588 = vmatpush1.msra.mxu0 0.0
    %589 = vmatprep.subr.mxu0 0.0
    %590 = vmatpush1.msra.mxu0 %v557
    %591 = vmatprep.subr.mxu0 0.0
    %592 = vmatpush2.msra.mxu0 0.0
    %593 = vmatprep.subr.mxu0 0.0
    %594 = vmatpush2.msra.mxu0 0.0
    %595 = vmatprep.subr.mxu0 0.0
    %596 = vmatpush2.msra.mxu0 0.0
    %597 = vmatprep.subr.mxu0 0.0
    %598 = vmatpush2.msra.mxu0 0.0
    %599 = vmatprep.subr.mxu0 0.0
    %600 = vmatpush2.msra.mxu0 0.0
    %601 = vmatprep.subr.mxu0 0.0
    %602 = vmatpush2.msra.mxu0 0.0
    %603 = vmatprep.subr.mxu0 0.0
    %604 = vmatpush2.msra.mxu0 0.0
    %605 = vmatprep.subr.mxu0 0.0
    %606 = vmatpush2.msra.mxu0 0.0
    %607 = vmatprep.subr.mxu0 0.0
    %608 = vmatpush2.msra.mxu0 0.0
    %609 = vmatprep.subr.mxu0 0.0
    %610 = vmatpush2.msra.mxu0 0.0
    %611 = vmatprep.subr.mxu0 0.0
    %612 = vmatpush2.msra.mxu0 0.0
    %613 = vmatprep.subr.mxu0 0.0
    %614 = vmatpush2.msra.mxu0 0.0
    %615 = vmatprep.subr.mxu0 0.0
    %616 = vmatpush2.msra.mxu0 0.0
    %617 = vmatprep.subr.mxu0 0.0
    %618 = vmatpush2.msra.mxu0 0.0
    %619 = vmatprep.subr.mxu0 0.0
    %620 = vmatpush2.msra.mxu0 0.0
    %621 = vmatprep.subr.mxu0 0.0
    %622 = vmatpush2.msra.mxu0 0.0
    %623 = vmatprep.mubr.f32.mxu0 0.0
    %624 = vmatmul.mubr.f32.gmra.mxu0 %v547
    %v625 = vpop.f32.mrf.mxu0
    %v626 = vadd.f32 0.0, %v625
    %v627 = vpop.f32.mrf.mxu0
    %628 = vmatprep.mubr.f32.mxu0 0.0
    %629 = vmatmul.mubr.f32.gmra.mxu0 %v550
    %v630 = vpop.f32.mrf.mxu0
    %v631 = vadd.f32 0.0, %v630
    %v632 = vpop.f32.mrf.mxu0
    %633 = vmatprep.mubr.f32.mxu0 0.0
    %634 = vmatmul.mubr.f32.gmra.mxu0 %v553
    %v635 = vpop.f32.mrf.mxu0
    %v636 = vadd.f32 0.0, %v635
    %v637 = vpop.f32.mrf.mxu0
    %638 = vdwg.mxu0
    %v639 = vpack.c.bf16 %v631, %v626
    %v640 = vpack.c.bf16 %v537, %v532
    %v641 = vpack.c.bf16 %v636, %v636
    %v642 = vpack.c.bf16 %v542, %v542
    %v675 = vunpack.c.l.b16 %v228
    %v676 = vunpack.c.l.b16 %v229
    %v677 = vunpack.c.l.b16 %v230
    %v678 = vunpack.c.l.b16 %v231
    %v679 = vunpack.c.l.b16 %v232
    %v680 = vunpack.c.l.b16 %v233
    %v681 = vunpack.c.l.b16 %v234
    %v682 = vunpack.c.l.b16 %v235
    %v683 = vunpack.c.l.b16 %v236
    %v684 = vunpack.c.l.b16 %v237
    %v685 = vunpack.c.l.b16 %v238
    %v686 = vunpack.c.l.b16 %v239
    %v687 = vunpack.c.l.b16 %v240
    %v688 = vunpack.c.l.b16 %v241
    %v689 = vunpack.c.l.b16 %v242
    %v690 = vunpack.c.l.b16 %v243
    %v691 = vunpack.c.l.b16 %v244
    %v692 = vunpack.c.l.b16 %v245
    %v693 = vunpack.c.l.b16 %v246
    %v694 = vunpack.c.l.b16 %v247
    %v695 = vunpack.c.l.b16 %v248
    %v696 = vunpack.c.l.b16 %v249
    %v697 = vunpack.c.l.b16 %v250
    %v698 = vunpack.c.l.b16 %v251
    %v699 = vunpack.c.l.b16 %v252
    %v700 = vunpack.c.l.b16 %v253
    %v701 = vunpack.c.l.b16 %v254
    %v702 = vunpack.c.l.b16 %v255
    %v703 = vunpack.c.l.b16 %v256
    %v704 = vunpack.c.l.b16 %v257
    %v705 = vunpack.c.l.b16 %v258
    %v706 = vunpack.c.l.b16 %v259
    %v707 = vpack.c.b16 %v676, %v675
    %v708 = vpack.c.b16 %v678, %v677
    %v709 = vpack.c.b16 %v680, %v679
    %v710 = vpack.c.b16 %v682, %v681
    %v711 = vpack.c.b16 %v684, %v683
    %v712 = vpack.c.b16 %v686, %v685
    %v713 = vpack.c.b16 %v688, %v687
    %v714 = vpack.c.b16 %v690, %v689
    %v715 = vpack.c.b16 %v692, %v691
    %v716 = vpack.c.b16 %v694, %v693
    %v717 = vpack.c.b16 %v696, %v695
    %v718 = vpack.c.b16 %v698, %v697
    %v719 = vpack.c.b16 %v700, %v699
    %v720 = vpack.c.b16 %v702, %v701
    %v721 = vpack.c.b16 %v704, %v703
    %v722 = vpack.c.b16 %v706, %v705
    %739 = vmatprep.subr.bf16.mxu0 0
    %740 = vmatpush1.bf16.msra.mxu0 %v714
    %741 = vmatprep.subr.bf16.mxu0 0
    %742 = vmatpush1.bf16.msra.mxu0 %v713
    %743 = vmatprep.subr.bf16.mxu0 0
    %744 = vmatpush1.bf16.msra.mxu0 %v712
    %745 = vmatprep.subr.bf16.mxu0 0
    %746 = vmatpush1.bf16.msra.mxu0 %v711
    %747 = vmatprep.subr.bf16.mxu0 0
    %748 = vmatpush1.bf16.msra.mxu0 %v710
    %749 = vmatprep.subr.bf16.mxu0 0
    %750 = vmatpush1.bf16.msra.mxu0 %v709
    %751 = vmatprep.subr.bf16.mxu0 0
    %752 = vmatpush1.bf16.msra.mxu0 %v708
    %753 = vmatprep.subr.bf16.mxu0 0
    %754 = vmatpush1.bf16.msra.mxu0 %v707
    %755 = vmatprep.subr.bf16.mxu0 0
    %756 = vmatpush2.bf16.msra.mxu0 %v722
    %757 = vmatprep.subr.bf16.mxu0 0
    %758 = vmatpush2.bf16.msra.mxu0 %v721
    %759 = vmatprep.subr.bf16.mxu0 0
    %760 = vmatpush2.bf16.msra.mxu0 %v720
    %761 = vmatprep.subr.bf16.mxu0 0
    %762 = vmatpush2.bf16.msra.mxu0 %v719
    %763 = vmatprep.subr.bf16.mxu0 0
    %764 = vmatpush2.bf16.msra.mxu0 %v718
    %765 = vmatprep.subr.bf16.mxu0 0
    %766 = vmatpush2.bf16.msra.mxu0 %v717
    %767 = vmatprep.subr.bf16.mxu0 0
    %768 = vmatpush2.bf16.msra.mxu0 %v716
    %769 = vmatprep.subr.bf16.mxu0 0
    %770 = vmatpush2.bf16.msra.mxu0 %v715
    %771 = vmatprep.mubr.bf16.mxu0 %v640
    %772 = vmatmul.mubr.bf16.gmra.mxu0 %v639
    %v773 = vpop.f32.mrf.mxu0
    %v774 = vadd.f32 0.0, %v773
    %v775 = vpop.f32.mrf.mxu0
    %v776 = vpop.f32.mrf.mxu0
    %v777 = vadd.f32 0.0, %v776
    %v778 = vpop.f32.mrf.mxu0
    %779 = vmatprep.mubr.bf16.mxu0 %v642
    %780 = vmatmul.mubr.bf16.gmra.mxu0 %v641
    %v781 = vpop.f32.mrf.mxu0
    %v782 = vadd.f32 0.0, %v781
    %v783 = vpop.f32.mrf.mxu0
    %v784 = vpop.f32.mrf.mxu0
    %v785 = vpop.f32.mrf.mxu0
    %786 = vdwg.mxu0
    %vm787 = vcmask 146432
    %v789 = vsel %vm787, %v192, 0
    %vm791 = vcmask 1041408
    %v793 = vsel %vm791, %v782, 0
    %795 = vmatprep.subr.mxu0 0.0
    %796 = vmatpush1.msra.mxu0 0.0
    %797 = vmatprep.subr.mxu0 0.0
    %798 = vmatpush1.msra.mxu0 0.0
    %799 = vmatprep.subr.mxu0 0.0
    %800 = vmatpush1.msra.mxu0 0.0
    %801 = vmatprep.subr.mxu0 0.0
    %802 = vmatpush1.msra.mxu0 0.0
    %803 = vmatprep.subr.mxu0 0.0
    %804 = vmatpush1.msra.mxu0 0.0
    %805 = vmatprep.subr.mxu0 0.0
    %806 = vmatpush1.msra.mxu0 0.0
    %807 = vmatprep.subr.mxu0 0.0
    %808 = vmatpush1.msra.mxu0 0.0
    %809 = vmatprep.subr.mxu0 0.0
    %810 = vmatpush1.msra.mxu0 0.0
    %811 = vmatprep.subr.mxu0 0.0
    %812 = vmatpush1.msra.mxu0 0.0
    %813 = vmatprep.subr.mxu0 0.0
    %814 = vmatpush1.msra.mxu0 0.0
    %815 = vmatprep.subr.mxu0 0.0
    %816 = vmatpush1.msra.mxu0 0.0
    %817 = vmatprep.subr.mxu0 0.0
    %818 = vmatpush1.msra.mxu0 0.0
    %819 = vmatprep.subr.mxu0 0.0
    %820 = vmatpush1.msra.mxu0 0.0
    %821 = vmatprep.subr.mxu0 0.0
    %822 = vmatpush1.msra.mxu0 %v793
    %823 = vmatprep.subr.mxu0 0.0
    %824 = vmatpush1.msra.mxu0 %v777
    %825 = vmatprep.subr.mxu0 0.0
    %826 = vmatpush1.msra.mxu0 %v774
    %827 = vmatprep.subr.mxu0 0.0
    %828 = vmatpush2.msra.mxu0 0.0
    %829 = vmatprep.subr.mxu0 0.0
    %830 = vmatpush2.msra.mxu0 0.0
    %831 = vmatprep.subr.mxu0 0.0
    %832 = vmatpush2.msra.mxu0 0.0
    %833 = vmatprep.subr.mxu0 0.0
    %834 = vmatpush2.msra.mxu0 0.0
    %835 = vmatprep.subr.mxu0 0.0
    %836 = vmatpush2.msra.mxu0 0.0
    %837 = vmatprep.subr.mxu0 0.0
    %838 = vmatpush2.msra.mxu0 0.0
    %839 = vmatprep.subr.mxu0 0.0
    %840 = vmatpush2.msra.mxu0 0.0
    %841 = vmatprep.subr.mxu0 0.0
    %842 = vmatpush2.msra.mxu0 0.0
    %843 = vmatprep.subr.mxu0 0.0
    %844 = vmatpush2.msra.mxu0 0.0
    %845 = vmatprep.subr.mxu0 0.0
    %846 = vmatpush2.msra.mxu0 0.0
    %847 = vmatprep.subr.mxu0 0.0
    %848 = vmatpush2.msra.mxu0 0.0
    %849 = vmatprep.subr.mxu0 0.0
    %850 = vmatpush2.msra.mxu0 0.0
    %851 = vmatprep.subr.mxu0 0.0
    %852 = vmatpush2.msra.mxu0 0.0
    %853 = vmatprep.subr.mxu0 0.0
    %854 = vmatpush2.msra.mxu0 0.0
    %855 = vmatprep.subr.mxu0 0.0
    %856 = vmatpush2.msra.mxu0 0.0
    %857 = vmatprep.subr.mxu0 0.0
    %858 = vmatpush2.msra.mxu0 0.0
    %859 = vmatprep.mubr.f32.mxu0 0.0
    %860 = vmatmul.mubr.f32.gmra.mxu0 %v789
    %v861 = vpop.f32.mrf.mxu0
    %v862 = vadd.f32 0.0, %v861
    %v863 = vpop.f32.mrf.mxu0
    %864 = vdwg.mxu0
    %v865 = vpack.c.bf16 %v181, %v181
    %v882 = vunpack.c.l.b16 %v212
    %v883 = vunpack.c.l.b16 %v213
    %v884 = vunpack.c.l.b16 %v214
    %v885 = vunpack.c.l.b16 %v215
    %v886 = vunpack.c.l.b16 %v216
    %v887 = vunpack.c.l.b16 %v217
    %v888 = vunpack.c.l.b16 %v218
    %v889 = vunpack.c.l.b16 %v219
    %v890 = vunpack.c.l.b16 %v220
    %v891 = vunpack.c.l.b16 %v221
    %v892 = vunpack.c.l.b16 %v222
    %v893 = vunpack.c.l.b16 %v223
    %v894 = vunpack.c.l.b16 %v224
    %v895 = vunpack.c.l.b16 %v225
    %v896 = vunpack.c.l.b16 %v226
    %v897 = vunpack.c.l.b16 %v227
    %v898 = vpack.c.b16 %v883, %v882
    %v899 = vpack.c.b16 %v885, %v884
    %v900 = vpack.c.b16 %v887, %v886
    %v901 = vpack.c.b16 %v889, %v888
    %v902 = vpack.c.b16 %v891, %v890
    %v903 = vpack.c.b16 %v893, %v892
    %v904 = vpack.c.b16 %v895, %v894
    %v905 = vpack.c.b16 %v897, %v896
    %914 = vmatprep.subr.bf16.mxu0 0
    %915 = vmatpush1.bf16.msra.mxu0 %v905
    %916 = vmatprep.subr.bf16.mxu0 0
    %917 = vmatpush1.bf16.msra.mxu0 %v904
    %918 = vmatprep.subr.bf16.mxu0 0
    %919 = vmatpush1.bf16.msra.mxu0 %v903
    %920 = vmatprep.subr.bf16.mxu0 0
    %921 = vmatpush1.bf16.msra.mxu0 %v902
    %922 = vmatprep.subr.bf16.mxu0 0
    %923 = vmatpush1.bf16.msra.mxu0 %v901
    %924 = vmatprep.subr.bf16.mxu0 0
    %925 = vmatpush1.bf16.msra.mxu0 %v900
    %926 = vmatprep.subr.bf16.mxu0 0
    %927 = vmatpush1.bf16.msra.mxu0 %v899
    %928 = vmatprep.subr.bf16.mxu0 0
    %929 = vmatpush1.bf16.msra.mxu0 %v898
    %930 = vmatprep.subr.bf16.mxu0 0
    %931 = vmatpush2.bf16.msra.mxu0 0
    %932 = vmatprep.subr.bf16.mxu0 0
    %933 = vmatpush2.bf16.msra.mxu0 0
    %934 = vmatprep.subr.bf16.mxu0 0
    %935 = vmatpush2.bf16.msra.mxu0 0
    %936 = vmatprep.subr.bf16.mxu0 0
    %937 = vmatpush2.bf16.msra.mxu0 0
    %938 = vmatprep.subr.bf16.mxu0 0
    %939 = vmatpush2.bf16.msra.mxu0 0
    %940 = vmatprep.subr.bf16.mxu0 0
    %941 = vmatpush2.bf16.msra.mxu0 0
    %942 = vmatprep.subr.bf16.mxu0 0
    %943 = vmatpush2.bf16.msra.mxu0 0
    %944 = vmatprep.subr.bf16.mxu0 0
    %945 = vmatpush2.bf16.msra.mxu0 0
    %946 = vmatprep.mubr.bf16.mxu0 0
    %947 = vmatmul.mubr.bf16.gmra.mxu0 %v865
    %v948 = vpop.f32.mrf.mxu0
    %v949 = vadd.f32 %v862, %v948
    %v950 = vpop.f32.mrf.mxu0
    %v951 = vpop.f32.mrf.mxu0
    %v952 = vpop.f32.mrf.mxu0
    %953 = vdwg.mxu0
    %v954 = vsel %vm555, %v949, 0.0
    %v955 = vrot.slane %v954, 4
    %v956 = vadd.f32 %v954, %v955
    %v957 = vrot.slane %v956, 2
    %v958 = vadd.f32 %v956, %v957
    %v959 = vrot.slane %v958, 1
    %v960 = vadd.f32 %v958, %v959
    %v961 = vrcp.pop 7.0
    %v962 = vmul.f32 %v960, %v961
    %v963 = vsub.f32 %v949, %v962
    %v964 = vmul.f32 %v963, %v963
    %v965 = vsel %vm555, %v964, 0.0
    %v966 = vrot.slane %v965, 4
    %v967 = vadd.f32 %v965, %v966
    %v968 = vrot.slane %v967, 2
    %v969 = vadd.f32 %v967, %v968
    %v970 = vrot.slane %v969, 1
    %v971 = vadd.f32 %v969, %v970
    %v972 = vmul.f32 %v971, %v961
    %v973 = vadd.f32 %v972, 1e-05
    %v974 = vrsqrt.pop %v973
    %v975 = vmul.f32 %v963, %v974
    %v977 = vlaneseq
    %v978 = vshrl.u32 %v977, 7
    %v979 = vsub.s32 0, %v978
    %v980 = vrot.slane %v260, %v979
    %v982 = vmul.f32 %v975, %v980
    %v984 = vlaneseq
    %v985 = vshrl.u32 %v984, 7
    %v986 = vsub.s32 0, %v985
    %v987 = vrot.slane %v261, %v986
    %v989 = vadd.f32 %v982, %v987
    %v990 = vmax.f32 %v989, 0.0
    %v991 = vadd.f32 %v990, %v181
    %v992 = vpack.c.bf16 %v454, %v454
    %v1009 = vunpack.c.l.b16 %v262
    %v1010 = vunpack.c.l.b16 %v263
    %v1011 = vunpack.c.l.b16 %v264
    %v1012 = vunpack.c.l.b16 %v265
    %v1013 = vunpack.c.l.b16 %v266
    %v1014 = vunpack.c.l.b16 %v267
    %v1015 = vunpack.c.l.b16 %v268
    %v1016 = vunpack.c.l.b16 %v269
    %v1017 = vunpack.c.l.b16 %v270
    %v1018 = vunpack.c.l.b16 %v271
    %v1019 = vunpack.c.l.b16 %v272
    %v1020 = vunpack.c.l.b16 %v273
    %v1021 = vunpack.c.l.b16 %v274
    %v1022 = vunpack.c.l.b16 %v275
    %v1023 = vunpack.c.l.b16 %v276
    %v1024 = vunpack.c.l.b16 %v277
    %v1025 = vpack.c.b16 %v1010, %v1009
    %v1026 = vpack.c.b16 %v1012, %v1011
    %v1027 = vpack.c.b16 %v1014, %v1013
    %v1028 = vpack.c.b16 %v1016, %v1015
    %v1029 = vpack.c.b16 %v1018, %v1017
    %v1030 = vpack.c.b16 %v1020, %v1019
    %v1031 = vpack.c.b16 %v1022, %v1021
    %v1032 = vpack.c.b16 %v1024, %v1023
    %1041 = vmatprep.subr.bf16.mxu0 0
    %1042 = vmatpush1.bf16.msra.mxu0 %v1032
    %1043 = vmatprep.subr.bf16.mxu0 0
    %1044 = vmatpush1.bf16.msra.mxu0 %v1031
    %1045 = vmatprep.subr.bf16.mxu0 0
    %1046 = vmatpush1.bf16.msra.mxu0 %v1030
    %1047 = vmatprep.subr.bf16.mxu0 0
    %1048 = vmatpush1.bf16.msra.mxu0 %v1029
    %1049 = vmatprep.subr.bf16.mxu0 0
    %1050 = vmatpush1.bf16.msra.mxu0 %v1028
    %1051 = vmatprep.subr.bf16.mxu0 0
    %1052 = vmatpush1.bf16.msra.mxu0 %v1027
    %1053 = vmatprep.subr.bf16.mxu0 0
    %1054 = vmatpush1.bf16.msra.mxu0 %v1026
    %1055 = vmatprep.subr.bf16.mxu0 0
    %1056 = vmatpush1.bf16.msra.mxu0 %v1025
    %1057 = vmatprep.subr.bf16.mxu0 0
    %1058 = vmatpush2.bf16.msra.mxu0 0
    %1059 = vmatprep.subr.bf16.mxu0 0
    %1060 = vmatpush2.bf16.msra.mxu0 0
    %1061 = vmatprep.subr.bf16.mxu0 0
    %1062 = vmatpush2.bf16.msra.mxu0 0
    %1063 = vmatprep.subr.bf16.mxu0 0
    %1064 = vmatpush2.bf16.msra.mxu0 0
    %1065 = vmatprep.subr.bf16.mxu0 0
    %1066 = vmatpush2.bf16.msra.mxu0 0
    %1067 = vmatprep.subr.bf16.mxu0 0
    %1068 = vmatpush2.bf16.msra.mxu0 0
    %1069 = vmatprep.subr.bf16.mxu0 0
    %1070 = vmatpush2.bf16.msra.mxu0 0
    %1071 = vmatprep.subr.bf16.mxu0 0
    %1072 = vmatpush2.bf16.msra.mxu0 0
    %1073 = vmatprep.mubr.bf16.mxu0 0
    %1074 = vmatmul.mubr.bf16.gmra.mxu0 %v992
    %v1075 = vpop.f32.mrf.mxu0
    %v1076 = vadd.f32 0.0, %v1075
    %v1077 = vpop.f32.mrf.mxu0
    %v1078 = vpop.f32.mrf.mxu0
    %v1079 = vpop.f32.mrf.mxu0
    %1080 = vdwg.mxu0
    %v1081 = vrot.slane %v1076, 4
    %v1082 = vadd.f32 %v1076, %v1081
    %v1083 = vrot.slane %v1082, 2
    %v1084 = vadd.f32 %v1082, %v1083
    %v1085 = vrot.slane %v1084, 1
    %v1086 = vadd.f32 %v1084, %v1085
    %v1087 = vmul.f32 %v1086, %v425
    %v1088 = vsub.f32 %v1076, %v1087
    %v1089 = vmul.f32 %v1088, %v1088
    %v1090 = vrot.slane %v1089, 4
    %v1091 = vadd.f32 %v1089, %v1090
    %v1092 = vrot.slane %v1091, 2
    %v1093 = vadd.f32 %v1091, %v1092
    %v1094 = vrot.slane %v1093, 1
    %v1095 = vadd.f32 %v1093, %v1094
    %v1096 = vmul.f32 %v1095, %v425
    %v1097 = vadd.f32 %v1096, 1e-05
    %v1098 = vrsqrt.pop %v1097
    %v1099 = vmul.f32 %v1088, %v1098
    %v1101 = vlaneseq
    %v1102 = vshrl.u32 %v1101, 7
    %v1103 = vsub.s32 0, %v1102
    %v1104 = vrot.slane %v278, %v1103
    %v1106 = vmul.f32 %v1099, %v1104
    %v1108 = vlaneseq
    %v1109 = vshrl.u32 %v1108, 7
    %v1110 = vsub.s32 0, %v1109
    %v1111 = vrot.slane %v279, %v1110
    %v1113 = vadd.f32 %v1106, %v1111
    %v1114 = vmax.f32 %v1113, 0.0
    %v1115 = vsub.f32 0.0, %v1114
    %v1116 = vadd.f32 %v1115, %v454
    %1117 = vmatprep.subr.mxu0 0.0
    %1118 = vmatpush1.msra.mxu0 0.0
    %1119 = vmatprep.subr.mxu0 0.0
    %1120 = vmatpush1.msra.mxu0 0.0
    %1121 = vmatprep.subr.mxu0 0.0
    %1122 = vmatpush1.msra.mxu0 0.0
    %1123 = vmatprep.subr.mxu0 0.0
    %1124 = vmatpush1.msra.mxu0 0.0
    %1125 = vmatprep.subr.mxu0 0.0
    %1126 = vmatpush1.msra.mxu0 0.0
    %1127 = vmatprep.subr.mxu0 0.0
    %1128 = vmatpush1.msra.mxu0 0.0
    %1129 = vmatprep.subr.mxu0 0.0
    %1130 = vmatpush1.msra.mxu0 0.0
    %1131 = vmatprep.subr.mxu0 0.0
    %1132 = vmatpush1.msra.mxu0 0.0
    %1133 = vmatprep.subr.mxu0 0.0
    %1134 = vmatpush1.msra.mxu0 0.0
    %1135 = vmatprep.subr.mxu0 0.0
    %1136 = vmatpush1.msra.mxu0 0.0
    %1137 = vmatprep.subr.mxu0 0.0
    %1138 = vmatpush1.msra.mxu0 0.0
    %1139 = vmatprep.subr.mxu0 0.0
    %1140 = vmatpush1.msra.mxu0 0.0
    %1141 = vmatprep.subr.mxu0 0.0
    %1142 = vmatpush1.msra.mxu0 0.0
    %1143 = vmatprep.subr.mxu0 0.0
    %1144 = vmatpush1.msra.mxu0 0.0
    %1145 = vmatprep.subr.mxu0 0.0
    %1146 = vmatpush1.msra.mxu0 0.0
    %1147 = vmatprep.subr.mxu0 0.0
    %1148 = vmatpush1.msra.mxu0 %v1116
    %1149 = vmatprep.subr.mxu0 0.0
    %1150 = vmatpush2.msra.mxu0 0.0
    %1151 = vmatprep.subr.mxu0 0.0
    %1152 = vmatpush2.msra.mxu0 0.0
    %1153 = vmatprep.subr.mxu0 0.0
    %1154 = vmatpush2.msra.mxu0 0.0
    %1155 = vmatprep.subr.mxu0 0.0
    %1156 = vmatpush2.msra.mxu0 0.0
    %1157 = vmatprep.subr.mxu0 0.0
    %1158 = vmatpush2.msra.mxu0 0.0
    %1159 = vmatprep.subr.mxu0 0.0
    %1160 = vmatpush2.msra.mxu0 0.0
    %1161 = vmatprep.subr.mxu0 0.0
    %1162 = vmatpush2.msra.mxu0 0.0
    %1163 = vmatprep.subr.mxu0 0.0
    %1164 = vmatpush2.msra.mxu0 0.0
    %1165 = vmatprep.subr.mxu0 0.0
    %1166 = vmatpush2.msra.mxu0 0.0
    %1167 = vmatprep.subr.mxu0 0.0
    %1168 = vmatpush2.msra.mxu0 0.0
    %1169 = vmatprep.subr.mxu0 0.0
    %1170 = vmatpush2.msra.mxu0 0.0
    %1171 = vmatprep.subr.mxu0 0.0
    %1172 = vmatpush2.msra.mxu0 0.0
    %1173 = vmatprep.subr.mxu0 0.0
    %1174 = vmatpush2.msra.mxu0 0.0
    %1175 = vmatprep.subr.mxu0 0.0
    %1176 = vmatpush2.msra.mxu0 0.0
    %1177 = vmatprep.subr.mxu0 0.0
    %1178 = vmatpush2.msra.mxu0 0.0
    %1179 = vmatprep.subr.mxu0 0.0
    %1180 = vmatpush2.msra.mxu0 0.0
    %1181 = vmatprep.mubr.f32.mxu0 0.0
    %1182 = vmatmul.mubr.f32.gmra.mxu0 %v457
    %v1183 = vpop.f32.mrf.mxu0
    %v1184 = vadd.f32 %v186, %v1183
    %v1185 = vpop.f32.mrf.mxu0
    %1186 = vmatprep.mubr.f32.mxu0 0.0
    %1187 = vmatmul.mubr.f32.gmra.mxu0 %v460
    %v1188 = vpop.f32.mrf.mxu0
    %v1189 = vadd.f32 %v187, %v1188
    %v1190 = vpop.f32.mrf.mxu0
    %1191 = vmatprep.mubr.f32.mxu0 0.0
    %1192 = vmatmul.mubr.f32.gmra.mxu0 %v463
    %v1193 = vpop.f32.mrf.mxu0
    %v1194 = vadd.f32 %v188, %v1193
    %v1195 = vpop.f32.mrf.mxu0
    %1196 = vdwg.mxu0
    %v1198 = vsel %vm555, %v991, 0
    %1200 = vmatprep.subr.mxu0 0.0
    %1201 = vmatpush1.msra.mxu0 0.0
    %1202 = vmatprep.subr.mxu0 0.0
    %1203 = vmatpush1.msra.mxu0 0.0
    %1204 = vmatprep.subr.mxu0 0.0
    %1205 = vmatpush1.msra.mxu0 0.0
    %1206 = vmatprep.subr.mxu0 0.0
    %1207 = vmatpush1.msra.mxu0 0.0
    %1208 = vmatprep.subr.mxu0 0.0
    %1209 = vmatpush1.msra.mxu0 0.0
    %1210 = vmatprep.subr.mxu0 0.0
    %1211 = vmatpush1.msra.mxu0 0.0
    %1212 = vmatprep.subr.mxu0 0.0
    %1213 = vmatpush1.msra.mxu0 0.0
    %1214 = vmatprep.subr.mxu0 0.0
    %1215 = vmatpush1.msra.mxu0 0.0
    %1216 = vmatprep.subr.mxu0 0.0
    %1217 = vmatpush1.msra.mxu0 0.0
    %1218 = vmatprep.subr.mxu0 0.0
    %1219 = vmatpush1.msra.mxu0 0.0
    %1220 = vmatprep.subr.mxu0 0.0
    %1221 = vmatpush1.msra.mxu0 0.0
    %1222 = vmatprep.subr.mxu0 0.0
    %1223 = vmatpush1.msra.mxu0 0.0
    %1224 = vmatprep.subr.mxu0 0.0
    %1225 = vmatpush1.msra.mxu0 0.0
    %1226 = vmatprep.subr.mxu0 0.0
    %1227 = vmatpush1.msra.mxu0 0.0
    %1228 = vmatprep.subr.mxu0 0.0
    %1229 = vmatpush1.msra.mxu0 0.0
    %1230 = vmatprep.subr.mxu0 0.0
    %1231 = vmatpush1.msra.mxu0 %v1198
    %1232 = vmatprep.subr.mxu0 0.0
    %1233 = vmatpush2.msra.mxu0 0.0
    %1234 = vmatprep.subr.mxu0 0.0
    %1235 = vmatpush2.msra.mxu0 0.0
    %1236 = vmatprep.subr.mxu0 0.0
    %1237 = vmatpush2.msra.mxu0 0.0
    %1238 = vmatprep.subr.mxu0 0.0
    %1239 = vmatpush2.msra.mxu0 0.0
    %1240 = vmatprep.subr.mxu0 0.0
    %1241 = vmatpush2.msra.mxu0 0.0
    %1242 = vmatprep.subr.mxu0 0.0
    %1243 = vmatpush2.msra.mxu0 0.0
    %1244 = vmatprep.subr.mxu0 0.0
    %1245 = vmatpush2.msra.mxu0 0.0
    %1246 = vmatprep.subr.mxu0 0.0
    %1247 = vmatpush2.msra.mxu0 0.0
    %1248 = vmatprep.subr.mxu0 0.0
    %1249 = vmatpush2.msra.mxu0 0.0
    %1250 = vmatprep.subr.mxu0 0.0
    %1251 = vmatpush2.msra.mxu0 0.0
    %1252 = vmatprep.subr.mxu0 0.0
    %1253 = vmatpush2.msra.mxu0 0.0
    %1254 = vmatprep.subr.mxu0 0.0
    %1255 = vmatpush2.msra.mxu0 0.0
    %1256 = vmatprep.subr.mxu0 0.0
    %1257 = vmatpush2.msra.mxu0 0.0
    %1258 = vmatprep.subr.mxu0 0.0
    %1259 = vmatpush2.msra.mxu0 0.0
    %1260 = vmatprep.subr.mxu0 0.0
    %1261 = vmatpush2.msra.mxu0 0.0
    %1262 = vmatprep.subr.mxu0 0.0
    %1263 = vmatpush2.msra.mxu0 0.0
    %1264 = vmatprep.mubr.f32.mxu0 0.0
    %1265 = vmatmul.mubr.f32.gmra.mxu0 %v547
    %v1266 = vpop.f32.mrf.mxu0
    %v1267 = vadd.f32 0.0, %v1266
    %v1268 = vpop.f32.mrf.mxu0
    %1269 = vmatprep.mubr.f32.mxu0 0.0
    %1270 = vmatmul.mubr.f32.gmra.mxu0 %v550
    %v1271 = vpop.f32.mrf.mxu0
    %v1272 = vadd.f32 0.0, %v1271
    %v1273 = vpop.f32.mrf.mxu0
    %1274 = vmatprep.mubr.f32.mxu0 0.0
    %1275 = vmatmul.mubr.f32.gmra.mxu0 %v553
    %v1276 = vpop.f32.mrf.mxu0
    %v1277 = vadd.f32 0.0, %v1276
    %v1278 = vpop.f32.mrf.mxu0
    %1279 = vdwg.mxu0
    %v1280 = vpack.c.bf16 %v1272, %v1267
    %v1281 = vpack.c.bf16 %v1189, %v1184
    %v1282 = vpack.c.bf16 %v1277, %v1277
    %v1283 = vpack.c.bf16 %v1194, %v1194
    %v1316 = vunpack.c.l.b16 %v296
    %v1317 = vunpack.c.l.b16 %v297
    %v1318 = vunpack.c.l.b16 %v298
    %v1319 = vunpack.c.l.b16 %v299
    %v1320 = vunpack.c.l.b16 %v300
    %v1321 = vunpack.c.l.b16 %v301
    %v1322 = vunpack.c.l.b16 %v302
    %v1323 = vunpack.c.l.b16 %v303
    %v1324 = vunpack.c.l.b16 %v304
    %v1325 = vunpack.c.l.b16 %v305
    %v1326 = vunpack.c.l.b16 %v306
    %v1327 = vunpack.c.l.b16 %v307
    %v1328 = vunpack.c.l.b16 %v308
    %v1329 = vunpack.c.l.b16 %v309
    %v1330 = vunpack.c.l.b16 %v310
    %v1331 = vunpack.c.l.b16 %v311
    %v1332 = vunpack.c.l.b16 %v312
    %v1333 = vunpack.c.l.b16 %v313
    %v1334 = vunpack.c.l.b16 %v314
    %v1335 = vunpack.c.l.b16 %v315
    %v1336 = vunpack.c.l.b16 %v316
    %v1337 = vunpack.c.l.b16 %v317
    %v1338 = vunpack.c.l.b16 %v318
    %v1339 = vunpack.c.l.b16 %v319
    %v1340 = vunpack.c.l.b16 %v320
    %v1341 = vunpack.c.l.b16 %v321
    %v1342 = vunpack.c.l.b16 %v322
    %v1343 = vunpack.c.l.b16 %v323
    %v1344 = vunpack.c.l.b16 %v324
    %v1345 = vunpack.c.l.b16 %v325
    %v1346 = vunpack.c.l.b16 %v326
    %v1347 = vunpack.c.l.b16 %v327
    %v1348 = vpack.c.b16 %v1317, %v1316
    %v1349 = vpack.c.b16 %v1319, %v1318
    %v1350 = vpack.c.b16 %v1321, %v1320
    %v1351 = vpack.c.b16 %v1323, %v1322
    %v1352 = vpack.c.b16 %v1325, %v1324
    %v1353 = vpack.c.b16 %v1327, %v1326
    %v1354 = vpack.c.b16 %v1329, %v1328
    %v1355 = vpack.c.b16 %v1331, %v1330
    %v1356 = vpack.c.b16 %v1333, %v1332
    %v1357 = vpack.c.b16 %v1335, %v1334
    %v1358 = vpack.c.b16 %v1337, %v1336
    %v1359 = vpack.c.b16 %v1339, %v1338
    %v1360 = vpack.c.b16 %v1341, %v1340
    %v1361 = vpack.c.b16 %v1343, %v1342
    %v1362 = vpack.c.b16 %v1345, %v1344
    %v1363 = vpack.c.b16 %v1347, %v1346
    %1380 = vmatprep.subr.bf16.mxu0 0
    %1381 = vmatpush1.bf16.msra.mxu0 %v1355
    %1382 = vmatprep.subr.bf16.mxu0 0
    %1383 = vmatpush1.bf16.msra.mxu0 %v1354
    %1384 = vmatprep.subr.bf16.mxu0 0
    %1385 = vmatpush1.bf16.msra.mxu0 %v1353
    %1386 = vmatprep.subr.bf16.mxu0 0
    %1387 = vmatpush1.bf16.msra.mxu0 %v1352
    %1388 = vmatprep.subr.bf16.mxu0 0
    %1389 = vmatpush1.bf16.msra.mxu0 %v1351
    %1390 = vmatprep.subr.bf16.mxu0 0
    %1391 = vmatpush1.bf16.msra.mxu0 %v1350
    %1392 = vmatprep.subr.bf16.mxu0 0
    %1393 = vmatpush1.bf16.msra.mxu0 %v1349
    %1394 = vmatprep.subr.bf16.mxu0 0
    %1395 = vmatpush1.bf16.msra.mxu0 %v1348
    %1396 = vmatprep.subr.bf16.mxu0 0
    %1397 = vmatpush2.bf16.msra.mxu0 %v1363
    %1398 = vmatprep.subr.bf16.mxu0 0
    %1399 = vmatpush2.bf16.msra.mxu0 %v1362
    %1400 = vmatprep.subr.bf16.mxu0 0
    %1401 = vmatpush2.bf16.msra.mxu0 %v1361
    %1402 = vmatprep.subr.bf16.mxu0 0
    %1403 = vmatpush2.bf16.msra.mxu0 %v1360
    %1404 = vmatprep.subr.bf16.mxu0 0
    %1405 = vmatpush2.bf16.msra.mxu0 %v1359
    %1406 = vmatprep.subr.bf16.mxu0 0
    %1407 = vmatpush2.bf16.msra.mxu0 %v1358
    %1408 = vmatprep.subr.bf16.mxu0 0
    %1409 = vmatpush2.bf16.msra.mxu0 %v1357
    %1410 = vmatprep.subr.bf16.mxu0 0
    %1411 = vmatpush2.bf16.msra.mxu0 %v1356
    %1412 = vmatprep.mubr.bf16.mxu0 %v1281
    %1413 = vmatmul.mubr.bf16.gmra.mxu0 %v1280
    %v1414 = vpop.f32.mrf.mxu0
    %v1415 = vadd.f32 0.0, %v1414
    %v1416 = vpop.f32.mrf.mxu0
    %v1417 = vpop.f32.mrf.mxu0
    %v1418 = vadd.f32 0.0, %v1417
    %v1419 = vpop.f32.mrf.mxu0
    %1420 = vmatprep.mubr.bf16.mxu0 %v1283
    %1421 = vmatmul.mubr.bf16.gmra.mxu0 %v1282
    %v1422 = vpop.f32.mrf.mxu0
    %v1423 = vadd.f32 0.0, %v1422
    %v1424 = vpop.f32.mrf.mxu0
    %v1425 = vpop.f32.mrf.mxu0
    %v1426 = vpop.f32.mrf.mxu0
    %1427 = vdwg.mxu0
    %v1429 = vsel %vm791, %v1423, 0
    %1431 = vmatprep.subr.mxu0 0.0
    %1432 = vmatpush1.msra.mxu0 0.0
    %1433 = vmatprep.subr.mxu0 0.0
    %1434 = vmatpush1.msra.mxu0 0.0
    %1435 = vmatprep.subr.mxu0 0.0
    %1436 = vmatpush1.msra.mxu0 0.0
    %1437 = vmatprep.subr.mxu0 0.0
    %1438 = vmatpush1.msra.mxu0 0.0
    %1439 = vmatprep.subr.mxu0 0.0
    %1440 = vmatpush1.msra.mxu0 0.0
    %1441 = vmatprep.subr.mxu0 0.0
    %1442 = vmatpush1.msra.mxu0 0.0
    %1443 = vmatprep.subr.mxu0 0.0
    %1444 = vmatpush1.msra.mxu0 0.0
    %1445 = vmatprep.subr.mxu0 0.0
    %1446 = vmatpush1.msra.mxu0 0.0
    %1447 = vmatprep.subr.mxu0 0.0
    %1448 = vmatpush1.msra.mxu0 0.0
    %1449 = vmatprep.subr.mxu0 0.0
    %1450 = vmatpush1.msra.mxu0 0.0
    %1451 = vmatprep.subr.mxu0 0.0
    %1452 = vmatpush1.msra.mxu0 0.0
    %1453 = vmatprep.subr.mxu0 0.0
    %1454 = vmatpush1.msra.mxu0 0.0
    %1455 = vmatprep.subr.mxu0 0.0
    %1456 = vmatpush1.msra.mxu0 0.0
    %1457 = vmatprep.subr.mxu0 0.0
    %1458 = vmatpush1.msra.mxu0 %v1429
    %1459 = vmatprep.subr.mxu0 0.0
    %1460 = vmatpush1.msra.mxu0 %v1418
    %1461 = vmatprep.subr.mxu0 0.0
    %1462 = vmatpush1.msra.mxu0 %v1415
    %1463 = vmatprep.subr.mxu0 0.0
    %1464 = vmatpush2.msra.mxu0 0.0
    %1465 = vmatprep.subr.mxu0 0.0
    %1466 = vmatpush2.msra.mxu0 0.0
    %1467 = vmatprep.subr.mxu0 0.0
    %1468 = vmatpush2.msra.mxu0 0.0
    %1469 = vmatprep.subr.mxu0 0.0
    %1470 = vmatpush2.msra.mxu0 0.0
    %1471 = vmatprep.subr.mxu0 0.0
    %1472 = vmatpush2.msra.mxu0 0.0
    %1473 = vmatprep.subr.mxu0 0.0
    %1474 = vmatpush2.msra.mxu0 0.0
    %1475 = vmatprep.subr.mxu0 0.0
    %1476 = vmatpush2.msra.mxu0 0.0
    %1477 = vmatprep.subr.mxu0 0.0
    %1478 = vmatpush2.msra.mxu0 0.0
    %1479 = vmatprep.subr.mxu0 0.0
    %1480 = vmatpush2.msra.mxu0 0.0
    %1481 = vmatprep.subr.mxu0 0.0
    %1482 = vmatpush2.msra.mxu0 0.0
    %1483 = vmatprep.subr.mxu0 0.0
    %1484 = vmatpush2.msra.mxu0 0.0
    %1485 = vmatprep.subr.mxu0 0.0
    %1486 = vmatpush2.msra.mxu0 0.0
    %1487 = vmatprep.subr.mxu0 0.0
    %1488 = vmatpush2.msra.mxu0 0.0
    %1489 = vmatprep.subr.mxu0 0.0
    %1490 = vmatpush2.msra.mxu0 0.0
    %1491 = vmatprep.subr.mxu0 0.0
    %1492 = vmatpush2.msra.mxu0 0.0
    %1493 = vmatprep.subr.mxu0 0.0
    %1494 = vmatpush2.msra.mxu0 0.0
    %1495 = vmatprep.mubr.f32.mxu0 0.0
    %1496 = vmatmul.mubr.f32.gmra.mxu0 %v789
    %v1497 = vpop.f32.mrf.mxu0
    %v1498 = vadd.f32 0.0, %v1497
    %v1499 = vpop.f32.mrf.mxu0
    %1500 = vdwg.mxu0
    %v1501 = vpack.c.bf16 %v991, %v991
    %v1518 = vunpack.c.l.b16 %v280
    %v1519 = vunpack.c.l.b16 %v281
    %v1520 = vunpack.c.l.b16 %v282
    %v1521 = vunpack.c.l.b16 %v283
    %v1522 = vunpack.c.l.b16 %v284
    %v1523 = vunpack.c.l.b16 %v285
    %v1524 = vunpack.c.l.b16 %v286
    %v1525 = vunpack.c.l.b16 %v287
    %v1526 = vunpack.c.l.b16 %v288
    %v1527 = vunpack.c.l.b16 %v289
    %v1528 = vunpack.c.l.b16 %v290
    %v1529 = vunpack.c.l.b16 %v291
    %v1530 = vunpack.c.l.b16 %v292
    %v1531 = vunpack.c.l.b16 %v293
    %v1532 = vunpack.c.l.b16 %v294
    %v1533 = vunpack.c.l.b16 %v295
    %v1534 = vpack.c.b16 %v1519, %v1518
    %v1535 = vpack.c.b16 %v1521, %v1520
    %v1536 = vpack.c.b16 %v1523, %v1522
    %v1537 = vpack.c.b16 %v1525, %v1524
    %v1538 = vpack.c.b16 %v1527, %v1526
    %v1539 = vpack.c.b16 %v1529, %v1528
    %v1540 = vpack.c.b16 %v1531, %v1530
    %v1541 = vpack.c.b16 %v1533, %v1532
    %1550 = vmatprep.subr.bf16.mxu0 0
    %1551 = vmatpush1.bf16.msra.mxu0 %v1541
    %1552 = vmatprep.subr.bf16.mxu0 0
    %1553 = vmatpush1.bf16.msra.mxu0 %v1540
    %1554 = vmatprep.subr.bf16.mxu0 0
    %1555 = vmatpush1.bf16.msra.mxu0 %v1539
    %1556 = vmatprep.subr.bf16.mxu0 0
    %1557 = vmatpush1.bf16.msra.mxu0 %v1538
    %1558 = vmatprep.subr.bf16.mxu0 0
    %1559 = vmatpush1.bf16.msra.mxu0 %v1537
    %1560 = vmatprep.subr.bf16.mxu0 0
    %1561 = vmatpush1.bf16.msra.mxu0 %v1536
    %1562 = vmatprep.subr.bf16.mxu0 0
    %1563 = vmatpush1.bf16.msra.mxu0 %v1535
    %1564 = vmatprep.subr.bf16.mxu0 0
    %1565 = vmatpush1.bf16.msra.mxu0 %v1534
    %1566 = vmatprep.subr.bf16.mxu0 0
    %1567 = vmatpush2.bf16.msra.mxu0 0
    %1568 = vmatprep.subr.bf16.mxu0 0
    %1569 = vmatpush2.bf16.msra.mxu0 0
    %1570 = vmatprep.subr.bf16.mxu0 0
    %1571 = vmatpush2.bf16.msra.mxu0 0
    %1572 = vmatprep.subr.bf16.mxu0 0
    %1573 = vmatpush2.bf16.msra.mxu0 0
    %1574 = vmatprep.subr.bf16.mxu0 0
    %1575 = vmatpush2.bf16.msra.mxu0 0
    %1576 = vmatprep.subr.bf16.mxu0 0
    %1577 = vmatpush2.bf16.msra.mxu0 0
    %1578 = vmatprep.subr.bf16.mxu0 0
    %1579 = vmatpush2.bf16.msra.mxu0 0
    %1580 = vmatprep.subr.bf16.mxu0 0
    %1581 = vmatpush2.bf16.msra.mxu0 0
    %1582 = vmatprep.mubr.bf16.mxu0 0
    %1583 = vmatmul.mubr.bf16.gmra.mxu0 %v1501
    %v1584 = vpop.f32.mrf.mxu0
    %v1585 = vadd.f32 %v1498, %v1584
    %v1586 = vpop.f32.mrf.mxu0
    %v1587 = vpop.f32.mrf.mxu0
    %v1588 = vpop.f32.mrf.mxu0
    %1589 = vdwg.mxu0
    %v1590 = vsel %vm555, %v1585, 0.0
    %v1591 = vrot.slane %v1590, 4
    %v1592 = vadd.f32 %v1590, %v1591
    %v1593 = vrot.slane %v1592, 2
    %v1594 = vadd.f32 %v1592, %v1593
    %v1595 = vrot.slane %v1594, 1
    %v1596 = vadd.f32 %v1594, %v1595
    %v1597 = vmul.f32 %v1596, %v961
    %v1598 = vsub.f32 %v1585, %v1597
    %v1599 = vmul.f32 %v1598, %v1598
    %v1600 = vsel %vm555, %v1599, 0.0
    %v1601 = vrot.slane %v1600, 4
    %v1602 = vadd.f32 %v1600, %v1601
    %v1603 = vrot.slane %v1602, 2
    %v1604 = vadd.f32 %v1602, %v1603
    %v1605 = vrot.slane %v1604, 1
    %v1606 = vadd.f32 %v1604, %v1605
    %v1607 = vmul.f32 %v1606, %v961
    %v1608 = vadd.f32 %v1607, 1e-05
    %v1609 = vrsqrt.pop %v1608
    %v1610 = vmul.f32 %v1598, %v1609
    %v1612 = vlaneseq
    %v1613 = vshrl.u32 %v1612, 7
    %v1614 = vsub.s32 0, %v1613
    %v1615 = vrot.slane %v328, %v1614
    %v1617 = vmul.f32 %v1610, %v1615
    %v1619 = vlaneseq
    %v1620 = vshrl.u32 %v1619, 7
    %v1621 = vsub.s32 0, %v1620
    %v1622 = vrot.slane %v329, %v1621
    %v1624 = vadd.f32 %v1617, %v1622
    %v1625 = vmax.f32 %v1624, 0.0
    %v1626 = vsub.f32 0.0, %v1625
    %v1627 = vadd.f32 %v1626, %v991
    %v1629 = vsel %vm545, %v193, 0
    %v1632 = vsel %vm555, %v1627, 0
    %1634 = vmatprep.subr.mxu0 0.0
    %1635 = vmatpush1.msra.mxu0 0.0
    %1636 = vmatprep.subr.mxu0 0.0
    %1637 = vmatpush1.msra.mxu0 0.0
    %1638 = vmatprep.subr.mxu0 0.0
    %1639 = vmatpush1.msra.mxu0 0.0
    %1640 = vmatprep.subr.mxu0 0.0
    %1641 = vmatpush1.msra.mxu0 0.0
    %1642 = vmatprep.subr.mxu0 0.0
    %1643 = vmatpush1.msra.mxu0 0.0
    %1644 = vmatprep.subr.mxu0 0.0
    %1645 = vmatpush1.msra.mxu0 0.0
    %1646 = vmatprep.subr.mxu0 0.0
    %1647 = vmatpush1.msra.mxu0 0.0
    %1648 = vmatprep.subr.mxu0 0.0
    %1649 = vmatpush1.msra.mxu0 0.0
    %1650 = vmatprep.subr.mxu0 0.0
    %1651 = vmatpush1.msra.mxu0 0.0
    %1652 = vmatprep.subr.mxu0 0.0
    %1653 = vmatpush1.msra.mxu0 0.0
    %1654 = vmatprep.subr.mxu0 0.0
    %1655 = vmatpush1.msra.mxu0 0.0
    %1656 = vmatprep.subr.mxu0 0.0
    %1657 = vmatpush1.msra.mxu0 0.0
    %1658 = vmatprep.subr.mxu0 0.0
    %1659 = vmatpush1.msra.mxu0 0.0
    %1660 = vmatprep.subr.mxu0 0.0
    %1661 = vmatpush1.msra.mxu0 0.0
    %1662 = vmatprep.subr.mxu0 0.0
    %1663 = vmatpush1.msra.mxu0 0.0
    %1664 = vmatprep.subr.mxu0 0.0
    %1665 = vmatpush1.msra.mxu0 %v1632
    %1666 = vmatprep.subr.mxu0 0.0
    %1667 = vmatpush2.msra.mxu0 0.0
    %1668 = vmatprep.subr.mxu0 0.0
    %1669 = vmatpush2.msra.mxu0 0.0
    %1670 = vmatprep.subr.mxu0 0.0
    %1671 = vmatpush2.msra.mxu0 0.0
    %1672 = vmatprep.subr.mxu0 0.0
    %1673 = vmatpush2.msra.mxu0 0.0
    %1674 = vmatprep.subr.mxu0 0.0
    %1675 = vmatpush2.msra.mxu0 0.0
    %1676 = vmatprep.subr.mxu0 0.0
    %1677 = vmatpush2.msra.mxu0 0.0
    %1678 = vmatprep.subr.mxu0 0.0
    %1679 = vmatpush2.msra.mxu0 0.0
    %1680 = vmatprep.subr.mxu0 0.0
    %1681 = vmatpush2.msra.mxu0 0.0
    %1682 = vmatprep.subr.mxu0 0.0
    %1683 = vmatpush2.msra.mxu0 0.0
    %1684 = vmatprep.subr.mxu0 0.0
    %1685 = vmatpush2.msra.mxu0 0.0
    %1686 = vmatprep.subr.mxu0 0.0
    %1687 = vmatpush2.msra.mxu0 0.0
    %1688 = vmatprep.subr.mxu0 0.0
    %1689 = vmatpush2.msra.mxu0 0.0
    %1690 = vmatprep.subr.mxu0 0.0
    %1691 = vmatpush2.msra.mxu0 0.0
    %1692 = vmatprep.subr.mxu0 0.0
    %1693 = vmatpush2.msra.mxu0 0.0
    %1694 = vmatprep.subr.mxu0 0.0
    %1695 = vmatpush2.msra.mxu0 0.0
    %1696 = vmatprep.subr.mxu0 0.0
    %1697 = vmatpush2.msra.mxu0 0.0
    %1698 = vmatprep.mubr.f32.mxu0 0.0
    %1699 = vmatmul.mubr.f32.gmra.mxu0 %v1629
    %v1700 = vpop.f32.mrf.mxu0
    %v1701 = vadd.f32 0.0, %v1700
    %v1702 = vpop.f32.mrf.mxu0
    %1703 = vdwg.mxu0
    %1704 = vst [vmem:[#allocation16] sm:$0x7f] %v1627
    %1705 = vst [vmem:[#allocation17] sm:$0xff] %v1116
    %1706 = vst [vmem:[#allocation19] sm:$0xff] %v1184
    %1707 = vst [vmem:[#allocation19 + $0x8] sm:$0xff] %v1189
    %1708 = vst [vmem:[#allocation19 + $0x10] sm:$0x3] %v1194
    %1709 = vst [vmem:[#allocation20] sm:$0x3] %v1701
    // Predicated region
    $region118: #{tpu_custom_call.1} parent=1 // pred_check
      _
    $region119: #{tpu_custom_call.1} parent=1 // pred_check_branch
      %1711 = sbr.rel (0) target = $region121
    $region120: #{tpu_custom_call.1} parent=1 // pred_region
      %s1713 = ssub.s32 128, 128
      %1714 = vsyncadd [#allocation4], %s1713
      %s1716 = sshll.u32 [#allocation16], 4
      %s1717 = int_to_ptr.vmem [resolvable:$true] %s1716
      %1719 = dma.vmem_to_hbm [thread:$0]  %s1717, 128, %s21, [#allocation4]
    $region121: #{tpu_custom_call.1} parent=1 // pred_fallthru
      _
    // Predicated region
    $region122: #{tpu_custom_call.1} parent=1 // pred_check
      _
    $region123: #{tpu_custom_call.1} parent=1 // pred_check_branch
      %1721 = sbr.rel (0) target = $region125
    $region124: #{tpu_custom_call.1} parent=1 // pred_region
      %s1723 = ssub.s32 128, 128
      %1724 = vsyncadd [#allocation18], %s1723
      %s1726 = sshll.u32 [#allocation17], 4
      %s1727 = int_to_ptr.vmem [resolvable:$true] %s1726
      %1729 = dma.vmem_to_hbm [thread:$0]  %s1727, 128, %s22, [#allocation18]
    $region125: #{tpu_custom_call.1} parent=1 // pred_fallthru
      _
    // Predicated region
    $region126: #{tpu_custom_call.1} parent=1 // pred_check
      _
    $region127: #{tpu_custom_call.1} parent=1 // pred_check_branch
      %1731 = sbr.rel (0) target = $region129
    $region128: #{tpu_custom_call.1} parent=1 // pred_region
      %s1733 = ssub.s32 384, 384
      %1734 = vsyncadd [#allocation18], %s1733
      %s1735 = sshll.u32 [#allocation19], 4
      %s1736 = int_to_ptr.vmem [resolvable:$true] %s1735
      %1741 = dma.vmem_to_hbm [thread:$0]  %s1736, 384, %s23, [#allocation18], 128, 128, 8
    $region129: #{tpu_custom_call.1} parent=1 // pred_fallthru
      _
    // Predicated region
    $region130: #{tpu_custom_call.1} parent=1 // pred_check
      _
    $region131: #{tpu_custom_call.1} parent=1 // pred_check_branch
      %1743 = sbr.rel (0) target = $region133
    $region132: #{tpu_custom_call.1} parent=1 // pred_region
      %s1745 = ssub.s32 32, 32
      %1746 = vsyncadd [#allocation21], %s1745
      %s1748 = sshll.u32 [#allocation20], 4
      %s1749 = int_to_ptr.vmem [resolvable:$true] %s1748
      %1751 = dma.vmem_to_hbm [thread:$0]  %s1749, 32, %s24, [#allocation21]
    $region133: #{tpu_custom_call.1} parent=1 // pred_fallthru
      _
    // Predicated region
    $region134: #{tpu_custom_call.1} parent=1 // pred_check
      _
    $region135: #{tpu_custom_call.1} parent=1 // pred_check_branch
      %1753 = sbr.rel (0) target = $region137
    $region136: #{tpu_custom_call.1} parent=1 // pred_region
      %1754 = dma.done [#allocation4], 128
    $region137: #{tpu_custom_call.1} parent=1 // pred_fallthru
      _
    // Predicated region
    $region138: #{tpu_custom_call.1} parent=1 // pred_check
      _
    $region139: #{tpu_custom_call.1} parent=1 // pred_check_branch
      %1756 = sbr.rel (0) target = $region141
    $region140: #{tpu_custom_call.1} parent=1 // pred_region
      %1757 = dma.done [#allocation18], 128
    $region141: #{tpu_custom_call.1} parent=1 // pred_fallthru
      _
    // Predicated region
    $region142: #{tpu_custom_call.1} parent=1 // pred_check
      _
    $region143: #{tpu_custom_call.1} parent=1 // pred_check_branch
      %1759 = sbr.rel (0) target = $region145
    $region144: #{tpu_custom_call.1} parent=1 // pred_region
      %1760 = dma.done [#allocation18], 384
    $region145: #{tpu_custom_call.1} parent=1 // pred_fallthru
      _
    // Predicated region
    $region146: #{tpu_custom_call.1} parent=1 // pred_check
      _
    $region147: #{tpu_custom_call.1} parent=1 // pred_check_branch
      %1762 = sbr.rel (0) target = $region149
    $region148: #{tpu_custom_call.1} parent=1 // pred_region
      %1763 = dma.done [#allocation21], 32
    $region149: #{tpu_custom_call.1} parent=1 // pred_fallthru
      _
    %1764 = vsyncpa [#allocation3], 1
    %1765 = vsyncpa [#allocation6], 1
    %1766 = vsyncpa [#allocation9], 1
    %1767 = vsyncpa [#allocation12], 1
    %1768 = vsyncpa [#allocation15], 1
    %1769 = vsyncpa [#allocation4], 1
    %1770 = vsyncpa [#allocation18], 1
    %1771 = vsyncpa [#allocation21], 1

</llo_original>
